<compile_context>
chip_gen: v7x
topology: tpu7x:2x2x1
jax: 0.10.0
libtpu: 0.0.40
codegen_flags: <defaults>
</compile_context>

<pallas_src>
import math
import functools

import jax
import jax.numpy as jnp
from jax import lax
from jax.experimental import pallas as pl
from jax.experimental.pallas import tpu as pltpu


def _gru_update(gi, gh, h, H):
    """PyTorch GRU update from fused pre-activations.

    gi = x @ W_ih + b_ih,  gh = h @ W_hh + b_hh, columns ordered [r | z | n].
    n uses gi_n + r * gh_n so b_hn stays inside the r-gated term (PyTorch semantics).
    """
    rz = jax.nn.sigmoid(gi[:, : 2 * H] + gh[:, : 2 * H])
    r = rz[:, :H]
    z = rz[:, H:]
    n = jnp.tanh(gi[:, 2 * H:] + r * gh[:, 2 * H:])
    return (1.0 - z) * n + z * h


def grup_kernel(x_ref, eps_ref,
                wih_e_ref, bih_e_ref, w_big_ref, b_big_ref,
                wih_d_ref, bih_d_ref, wout_ref, bout_ref,
                out_ref, kl_ref,
                gi_scr, hdec_scr, he_scr, hd_scr, kl_scr,
                *, H, B, S, alpha):
    f32 = jnp.float32
    T, B_pad, I = x_ref.shape
    c = pl.program_id(0)
    n_chunks = pl.num_programs(0)

    # ---- chunk-0 init of cross-chunk carries ----
    @pl.when(c == 0)
    def _init():
        he_scr[...] = jnp.zeros_like(he_scr)
        hd_scr[...] = jnp.zeros_like(hd_scr)
        kl_scr[...] = jnp.zeros_like(kl_scr)
        kl_ref[...] = jnp.zeros_like(kl_ref)

    # ---- prologue: bulk encoder input projection for this chunk (off the
    # serial path; one (T*B_pad, I) @ (I, 3H) matmul). ----
    x2 = x_ref[...].reshape(T * B_pad, I)
    gi = jnp.dot(x2, wih_e_ref[...], preferred_element_type=f32) + bih_e_ref[...]
    gi_scr[...] = gi.reshape(T, B_pad, 3 * H)

    # ---- hoisted weight loads / bias broadcasts (JAX does not CSE broadcasts) ----
    w_big = w_big_ref[...]
    b_big = jnp.broadcast_to(b_big_ref[...], (B_pad, 6 * H + 2))
    wih_d = jnp.broadcast_to(wih_d_ref[...], (B_pad, 3 * H))   # decoder input size == 1
    bih_d = jnp.broadcast_to(bih_d_ref[...], (B_pad, 3 * H))

    def fused(h_e, h_d):
        # One block-structured MXU push per step:
        #   gh_e = h_e @ whh_e + bhh_e , ls = h_e @ w_ls + b_ls , gh_d = h_d @ whh_d + bhh_d
        lhs = jnp.concatenate([h_e, h_d], axis=1)                  # (B_pad, 2H)
        r = jnp.dot(lhs, w_big, preferred_element_type=f32) + b_big
        return r[:, :3 * H], r[:, 3 * H:3 * H + 2], r[:, 3 * H + 2:]

    def decoder_step(ls_lin, gh_d, h_d, eps_t, kl):
        loc = jax.nn.sigmoid(ls_lin[:, 0:1])
        scale = jax.nn.sigmoid(ls_lin[:, 1:2])
        log_scale = jax.nn.log_sigmoid(ls_lin[:, 1:2])   # numerically safe log(scale)
        # KL( N(loc, scale) || N(0, 1) ), vector-accumulated; reduced at the end.
        kl = kl + (-log_scale + 0.5 * (scale * scale + loc * loc) - 0.5)
        # reparameterized Normal(loc, scale).rsample()
        sample = loc + scale * eps_t
        # K=1 input projection: rank-1 broadcast multiply on the VPU (no MXU push)
        gi_d = sample * wih_d + bih_d
        return _gru_update(gi_d, gh_d, h_d, H), kl

    # ---- peeled iteration: encoder local step 0 only (decoder half of the
    # fused matmul belongs to the previous chunk's last step, already done). ----
    gh_e0, _, _ = fused(he_scr[...], hd_scr[...])
    h_e = _gru_update(gi_scr[0], gh_e0, he_scr[...], H)
    h_d = hd_scr[...]
    kl = kl_scr[...]

    # ---- skewed serial loop: encoder at local t, decoder at local t-1 ----
    def step(t, carry):
        h_e, h_d, kl = carry
        gh_e, ls_lin, gh_d = fused(h_e, h_d)
        h_d_new, kl = decoder_step(ls_lin, gh_d, h_d, eps_ref[t - 1], kl)
        hdec_scr[t - 1] = h_d_new
        h_e_new = _gru_update(gi_scr[t], gh_e, h_e, H)
        return h_e_new, h_d_new, kl

    h_e, h_d, kl = lax.fori_loop(1, T, step, (h_e, h_d, kl),
                                 unroll=min(4, max(T - 1, 1)))

    # ---- tail: decoder local step T-1 (uses the just-computed h_e) ----
    _, ls_lin, gh_d = fused(h_e, h_d)
    h_d, kl = decoder_step(ls_lin, gh_d, h_d, eps_ref[T - 1], kl)
    hdec_scr[T - 1] = h_d

    # ---- persist cross-chunk carries ----
    he_scr[...] = h_e
    hd_scr[...] = h_d
    kl_scr[...] = kl

    # ---- epilogue: bulk lane-dense readout for this chunk ----
    hdec2 = hdec_scr[...].reshape(T * B_pad, H)
    out2 = jnp.dot(hdec2, wout_ref[...], preferred_element_type=f32) + bout_ref[...]
    out_ref[...] = out2.reshape(out_ref.shape)

    @pl.when(c == n_chunks - 1)
    def _finalize_kl():
        # only the first B (real) batch rows contribute to the mean
        kl_ref[...] = (jnp.sum(kl[:B, :]) * (alpha / (S * B))).reshape(1, 1)


def grup_forward(x, eps, params, *, alpha=1.0, s_chunk=None):
    S, B, I = x.shape
    H = params["whh_e"].shape[0]
    O = params["w_out"].shape[1]
    f32 = jnp.float32

    B_pad = ((max(B, 1) + 7) // 8) * 8        # f32 sublane tile
    O_pad = ((O + 127) // 128) * 128          # lane-dense readout

    if s_chunk is None or S % s_chunk != 0:
        s_chunk = max(d for d in range(1, min(S, 64) + 1) if S % d == 0)
    n_chunks = S // s_chunk

    # ---- pad batch to B_pad (padded rows never mix with real rows) ----
    x_p = jnp.zeros((S, B_pad, I), f32).at[:, :B, :].set(x.astype(f32))
    eps_p = jnp.zeros((S, B_pad, 1), f32).at[:, :B, :].set(eps.astype(f32))

    # ---- pack the fused recurrent block weight [[whh_e, w_ls, 0],[0,0,whh_d]] ----
    w_big = jnp.zeros((2 * H, 6 * H + 2), f32)
    w_big = w_big.at[:H, :3 * H].set(params["whh_e"].astype(f32))
    w_big = w_big.at[:H, 3 * H:3 * H + 2].set(params["w_ls"].astype(f32))
    w_big = w_big.at[H:, 3 * H + 2:].set(params["whh_d"].astype(f32))
    b_big = jnp.concatenate(
        [params["bhh_e"], params["b_ls"], params["bhh_d"]], axis=1).astype(f32)

    # ---- lane-dense readout weights ----
    w_out_p = jnp.zeros((H, O_pad), f32).at[:, :O].set(params["w_out"].astype(f32))
    b_out_p = jnp.zeros((1, O_pad), f32).at[:, :O].set(params["b_out"].astype(f32))

    weights = [params["wih_e"].astype(f32), params["bih_e"].astype(f32),
               w_big, b_big,
               params["wih_d"].astype(f32), params["bih_d"].astype(f32),
               w_out_p, b_out_p]

    def full_spec(arr):
        return pl.BlockSpec(arr.shape, lambda i, n=arr.ndim: (0,) * n)

    in_specs = [
        pl.BlockSpec((s_chunk, B_pad, I), lambda i: (i, 0, 0)),
        pl.BlockSpec((s_chunk, B_pad, 1), lambda i: (i, 0, 0)),
    ] + [full_spec(w) for w in weights]

    out_specs = [
        pl.BlockSpec((s_chunk, B_pad, O_pad), lambda i: (i, 0, 0)),  # readout chunks
        pl.BlockSpec((1, 1), lambda i: (0, 0)),                      # scaled KL
    ]
    out_shape = [
        jax.ShapeDtypeStruct((S, B_pad, O_pad), f32),
        jax.ShapeDtypeStruct((1, 1), f32),
    ]

    scratch_shapes = [
        pltpu.VMEM((s_chunk, B_pad, 3 * H), f32),   # per-chunk encoder pre-activations
        pltpu.VMEM((s_chunk, B_pad, H), f32),       # per-chunk decoder hidden states
        pltpu.VMEM((B_pad, H), f32),                # encoder hidden carry (cross-chunk)
        pltpu.VMEM((B_pad, H), f32),                # decoder hidden carry (cross-chunk)
        pltpu.VMEM((B_pad, 1), f32),                # KL accumulator carry
    ]

    # ---- VMEM budget: double-buffered I/O blocks + weights + scratch, headroom ----
    def nbytes(shape):
        return 4 * math.prod(shape)
    io_bytes = 2 * (nbytes((s_chunk, B_pad, I)) + nbytes((s_chunk, B_pad, 1))
                    + nbytes((s_chunk, B_pad, O_pad)))
    w_bytes = 2 * sum(int(w.size) * 4 for w in weights)
    s_bytes = sum(nbytes(s) for s in [(s_chunk, B_pad, 3 * H), (s_chunk, B_pad, H),
                                      (B_pad, H), (B_pad, H), (B_pad, 1)])
    vmem_limit = int(1.5 * (io_bytes + w_bytes + s_bytes)) + (4 << 20)
    vmem_limit = max(16 << 20, min(vmem_limit, 96 << 20))

    kernel = functools.partial(grup_kernel, H=H, B=B, S=S, alpha=float(alpha))

    out_p, kl = pl.pallas_call(
        kernel,
        out_shape=out_shape,
        grid_spec=pltpu.PrefetchScalarGridSpec(
            num_scalar_prefetch=0,
            grid=(n_chunks,),
            in_specs=in_specs,
            out_specs=out_specs,
            scratch_shapes=scratch_shapes,
        ),
        compiler_params=pltpu.CompilerParams(
            dimension_semantics=("arbitrary",),
            vmem_limit_bytes=vmem_limit,
        ),
    )(x_p, eps_p, *weights)

    return out_p[:, :B, :O], kl[0, 0]


def init_params(key, input_size, hidden_size, output_size, emb_size=2):
    """Deterministic init matching PyTorch's shapes (uniform +-1/sqrt(H)),
    packed into the layout the wrapper expects (weights pre-transposed,
    gate columns ordered [r | z | n], biases as (1, n) rows)."""
    H = hidden_size
    ks = jax.random.split(key, 12)

    def u(k, shape, bound):
        return jax.random.uniform(k, shape, jnp.float32, -bound, bound)

    b_gru = 1.0 / math.sqrt(H)
    w_ih_e = u(ks[0], (3 * H, input_size), b_gru)
    w_hh_e = u(ks[1], (3 * H, H), b_gru)
    b_ih_e = u(ks[2], (3 * H,), b_gru)
    b_hh_e = u(ks[3], (3 * H,), b_gru)

    b_lin = 1.0 / math.sqrt(H)
    w_emb = u(ks[4], (emb_size, H), b_lin)      # rows: [loc, scale]
    bb_emb = u(ks[5], (emb_size,), b_lin)

    dec_in = emb_size // 2                      # == 1
    w_ih_d = u(ks[6], (3 * H, dec_in), b_gru)
    w_hh_d = u(ks[7], (3 * H, H), b_gru)
    b_ih_d = u(ks[8], (3 * H,), b_gru)
    b_hh_d = u(ks[9], (3 * H,), b_gru)

    w_out = u(ks[10], (output_size, H), b_lin)
    bb_out = u(ks[11], (output_size,), b_lin)

    return dict(
        wih_e=w_ih_e.T, bih_e=b_ih_e[None, :],    # (I, 3H), (1, 3H)
        whh_e=w_hh_e.T, bhh_e=b_hh_e[None, :],    # (H, 3H), (1, 3H)
        w_ls=w_emb.T, b_ls=bb_emb[None, :],       # (H, 2),  (1, 2)
        wih_d=w_ih_d.T, bih_d=b_ih_d[None, :],    # (1, 3H), (1, 3H)
        whh_d=w_hh_d.T, bhh_d=b_hh_d[None, :],    # (H, 3H), (1, 3H)
        w_out=w_out.T, b_out=bb_out[None, :],     # (H, O),  (1, O)
    )


def grup_reference(x, eps, params, *, alpha=1.0):
    """Pure-JAX reference for correctness checking (PyTorch GRU semantics)."""
    S, B, _ = x.shape
    H = params["whh_e"].shape[0]

    def cell(gi, h, whh, bhh):
        gh = h @ whh + bhh
        r = jax.nn.sigmoid(gi[:, :H] + gh[:, :H])
        z = jax.nn.sigmoid(gi[:, H:2 * H] + gh[:, H:2 * H])
        n = jnp.tanh(gi[:, 2 * H:] + r * gh[:, 2 * H:])
        return (1.0 - z) * n + z * h

    h_e = jnp.zeros((B, H), jnp.float32)
    h_d = jnp.zeros((B, H), jnp.float32)
    outs, kl_sum = [], jnp.float32(0.0)
    for t in range(S):
        gi_e = x[t] @ params["wih_e"] + params["bih_e"]
        h_e = cell(gi_e, h_e, params["whh_e"], params["bhh_e"])
        ls_lin = h_e @ params["w_ls"] + params["b_ls"]
        loc = jax.nn.sigmoid(ls_lin[:, 0:1])
        scale = jax.nn.sigmoid(ls_lin[:, 1:2])
        sample = loc + scale * eps[t]
        kl_sum += jnp.sum(-jax.nn.log_sigmoid(ls_lin[:, 1:2])
                          + 0.5 * (scale * scale + loc * loc) - 0.5)
        gi_d = sample @ params["wih_d"] + params["bih_d"]
        h_d = cell(gi_d, h_d, params["whh_d"], params["bhh_d"])
        outs.append(h_d @ params["w_out"] + params["b_out"])
    return jnp.stack(outs), kl_sum / (S * B) * alpha


if __name__ == "__main__":
    S, B = 8, 2
    input_size, hidden_size, output_size = 4, 32, 3

    key = jax.random.PRNGKey(0)
    kp, kx, ke = jax.random.split(key, 3)
    params = init_params(kp, input_size, hidden_size, output_size)
    x = jax.random.normal(kx, (S, B, input_size), jnp.float32)
    # Reparameterization noise for Normal.rsample(): generated deterministically
    # outside the kernel and fed in as an input.
    eps = jax.random.normal(ke, (S, B, 1), jnp.float32)

    # s_chunk=4 -> 2 time chunks: exercises the cross-chunk hidden/KL carries.
    out, kl = grup_forward(x, eps, params, alpha=1.0, s_chunk=4)
    out = jax.block_until_ready(out)
    kl = jax.block_until_ready(kl)

    ref_out, ref_kl = grup_reference(x, eps, params, alpha=1.0)
    assert out.shape == (S, B, output_size)
    assert jnp.allclose(out, ref_out, atol=1e-3, rtol=1e-3), "output mismatch vs reference"
    assert jnp.allclose(kl, ref_kl, atol=1e-3, rtol=1e-3), "kl mismatch vs reference"

    print("KERNEL_OK")
</pallas_src>

<mosaic_0001>
module attributes {stable_mosaic.version = 11 : i64} {
  func.func @grup_kernel(%arg0: i32, %arg1: memref<4x8x4xf32, #tpu.memory_space<vmem>>, %arg2: memref<4x8x1xf32, #tpu.memory_space<vmem>>, %arg3: memref<4x96xf32, #tpu.memory_space<vmem>>, %arg4: memref<1x96xf32, #tpu.memory_space<vmem>>, %arg5: memref<64x194xf32, #tpu.memory_space<vmem>>, %arg6: memref<1x194xf32, #tpu.memory_space<vmem>>, %arg7: memref<1x96xf32, #tpu.memory_space<vmem>>, %arg8: memref<1x96xf32, #tpu.memory_space<vmem>>, %arg9: memref<32x128xf32, #tpu.memory_space<vmem>>, %arg10: memref<1x128xf32, #tpu.memory_space<vmem>>, %arg11: memref<4x8x128xf32, #tpu.memory_space<vmem>>, %arg12: memref<1x1xf32, #tpu.memory_space<vmem>>, %arg13: memref<4x8x96xf32, #tpu.memory_space<vmem>>, %arg14: memref<4x8x32xf32, #tpu.memory_space<vmem>>, %arg15: memref<8x32xf32, #tpu.memory_space<vmem>>, %arg16: memref<8x32xf32, #tpu.memory_space<vmem>>, %arg17: memref<8x1xf32, #tpu.memory_space<vmem>>) attributes {dimension_semantics = [#tpu.dimension_semantics<arbitrary>], iteration_bounds = array<i64: 2>, scalar_prefetch = 0 : i64, scratch_operands = 5 : i64, tpu.core_type = #tpu.core_type<tc>, window_params = [{transform_indices = @transform_0, window_bounds = array<i64: 4, 8, 4>}, {transform_indices = @transform_1, window_bounds = array<i64: 4, 8, 1>}, {pipeline_mode = #tpu.pipeline_mode<synchronous>, transform_indices = @transform_2, window_bounds = array<i64: 4, 96>}, {pipeline_mode = #tpu.pipeline_mode<synchronous>, transform_indices = @transform_3, window_bounds = array<i64: 1, 96>}, {pipeline_mode = #tpu.pipeline_mode<synchronous>, transform_indices = @transform_4, window_bounds = array<i64: 64, 194>}, {pipeline_mode = #tpu.pipeline_mode<synchronous>, transform_indices = @transform_5, window_bounds = array<i64: 1, 194>}, {pipeline_mode = #tpu.pipeline_mode<synchronous>, transform_indices = @transform_6, window_bounds = array<i64: 1, 96>}, {pipeline_mode = #tpu.pipeline_mode<synchronous>, transform_indices = @transform_7, window_bounds = array<i64: 1, 96>}, {pipeline_mode = #tpu.pipeline_mode<synchronous>, transform_indices = @transform_8, window_bounds = array<i64: 32, 128>}, {pipeline_mode = #tpu.pipeline_mode<synchronous>, transform_indices = @transform_9, window_bounds = array<i64: 1, 128>}, {transform_indices = @transform_10, window_bounds = array<i64: 4, 8, 128>}, {pipeline_mode = #tpu.pipeline_mode<synchronous>, transform_indices = @transform_11, window_bounds = array<i64: 1, 1>}]} {
    %c0_i32 = arith.constant 0 : i32
    %0 = arith.cmpi eq, %arg0, %c0_i32 : i32
    %1 = arith.extui %0 : i1 to i32
    %c0_i32_0 = arith.constant 0 : i32
    %2 = arith.cmpi ne, %1, %c0_i32_0 : i32
    scf.if %2 {
      %cst_137 = arith.constant 0.000000e+00 : f32
      %460 = vector.broadcast %cst_137 : f32 to vector<8x32xf32>
      %c0_138 = arith.constant 0 : index
      %c0_139 = arith.constant 0 : index
      %461 = vector.load %arg15[%c0_138, %c0_139] : memref<8x32xf32, #tpu.memory_space<vmem>>, vector<8x32xf32>
      tpu.vector_store %arg15[%c0_138, %c0_139], %460 {strides = array<i32>} : memref<8x32xf32, #tpu.memory_space<vmem>>, vector<8x32xf32>,
      %cst_140 = arith.constant 0.000000e+00 : f32
      %462 = vector.broadcast %cst_140 : f32 to vector<8x32xf32>
      %c0_141 = arith.constant 0 : index
      %c0_142 = arith.constant 0 : index
      %463 = vector.load %arg16[%c0_141, %c0_142] : memref<8x32xf32, #tpu.memory_space<vmem>>, vector<8x32xf32>
      tpu.vector_store %arg16[%c0_141, %c0_142], %462 {strides = array<i32>} : memref<8x32xf32, #tpu.memory_space<vmem>>, vector<8x32xf32>,
      %cst_143 = arith.constant 0.000000e+00 : f32
      %464 = vector.broadcast %cst_143 : f32 to vector<8x1xf32>
      %c0_144 = arith.constant 0 : index
      %c0_145 = arith.constant 0 : index
      %465 = vector.load %arg17[%c0_144, %c0_145] : memref<8x1xf32, #tpu.memory_space<vmem>>, vector<8x1xf32>
      tpu.vector_store %arg17[%c0_144, %c0_145], %464 {strides = array<i32>} : memref<8x1xf32, #tpu.memory_space<vmem>>, vector<8x1xf32>,
      %cst_146 = arith.constant 0.000000e+00 : f32
      %466 = vector.broadcast %cst_146 : f32 to vector<1x1xf32>
      %c0_147 = arith.constant 0 : index
      %c0_148 = arith.constant 0 : index
      %467 = vector.load %arg12[%c0_147, %c0_148] : memref<1x1xf32, #tpu.memory_space<vmem>>, vector<1x1xf32>
      tpu.vector_store %arg12[%c0_147, %c0_148], %466 {strides = array<i32>} : memref<1x1xf32, #tpu.memory_space<vmem>>, vector<1x1xf32>,
    } else {
    }
    %c0 = arith.constant 0 : index
    %c0_1 = arith.constant 0 : index
    %c0_2 = arith.constant 0 : index
    %3 = vector.load %arg1[%c0, %c0_1, %c0_2] : memref<4x8x4xf32, #tpu.memory_space<vmem>>, vector<4x8x4xf32>
    %4 = vector.shape_cast %3 : vector<4x8x4xf32> to vector<32x4xf32>
    %c0_3 = arith.constant 0 : index
    %c0_4 = arith.constant 0 : index
    %5 = vector.load %arg3[%c0_3, %c0_4] : memref<4x96xf32, #tpu.memory_space<vmem>>, vector<4x96xf32>
    %cst = arith.constant dense<0.000000e+00> : vector<32x96xf32>
    %6 = tpu.matmul %4, %5, %cst {dimension_numbers = #tpu.dot_dimension_numbers<[1], [0], [0], [1], [0, 0, 1, 1], [], []>} : vector<32x4xf32>, vector<4x96xf32>, vector<32x96xf32> -> vector<32x96xf32>
    %c0_5 = arith.constant 0 : index
    %c0_6 = arith.constant 0 : index
    %7 = vector.load %arg4[%c0_5, %c0_6] : memref<1x96xf32, #tpu.memory_space<vmem>>, vector<1x96xf32>
    %8 = vector.broadcast %7 : vector<1x96xf32> to vector<32x96xf32>
    %9 = arith.addf %6, %8 : vector<32x96xf32>
    %10 = vector.shape_cast %9 : vector<32x96xf32> to vector<4x8x96xf32>
    %c0_7 = arith.constant 0 : index
    %c0_8 = arith.constant 0 : index
    %c0_9 = arith.constant 0 : index
    %11 = vector.load %arg13[%c0_7, %c0_8, %c0_9] : memref<4x8x96xf32, #tpu.memory_space<vmem>>, vector<4x8x96xf32>
    tpu.vector_store %arg13[%c0_7, %c0_8, %c0_9], %10 {strides = array<i32>} : memref<4x8x96xf32, #tpu.memory_space<vmem>>, vector<4x8x96xf32>,
    %c0_10 = arith.constant 0 : index
    %c0_11 = arith.constant 0 : index
    %12 = vector.load %arg5[%c0_10, %c0_11] : memref<64x194xf32, #tpu.memory_space<vmem>>, vector<64x194xf32>
    %c0_12 = arith.constant 0 : index
    %c0_13 = arith.constant 0 : index
    %13 = vector.load %arg6[%c0_12, %c0_13] : memref<1x194xf32, #tpu.memory_space<vmem>>, vector<1x194xf32>
    %14 = vector.shape_cast %13 : vector<1x194xf32> to vector<1x194xf32>
    %15 = vector.broadcast %14 : vector<1x194xf32> to vector<8x194xf32>
    %c0_14 = arith.constant 0 : index
    %c0_15 = arith.constant 0 : index
    %16 = vector.load %arg7[%c0_14, %c0_15] : memref<1x96xf32, #tpu.memory_space<vmem>>, vector<1x96xf32>
    %17 = vector.shape_cast %16 : vector<1x96xf32> to vector<1x96xf32>
    %18 = vector.broadcast %17 : vector<1x96xf32> to vector<8x96xf32>
    %c0_16 = arith.constant 0 : index
    %c0_17 = arith.constant 0 : index
    %19 = vector.load %arg8[%c0_16, %c0_17] : memref<1x96xf32, #tpu.memory_space<vmem>>, vector<1x96xf32>
    %20 = vector.shape_cast %19 : vector<1x96xf32> to vector<1x96xf32>
    %21 = vector.broadcast %20 : vector<1x96xf32> to vector<8x96xf32>
    %c0_18 = arith.constant 0 : index
    %c0_19 = arith.constant 0 : index
    %22 = vector.load %arg15[%c0_18, %c0_19] : memref<8x32xf32, #tpu.memory_space<vmem>>, vector<8x32xf32>
    %c0_20 = arith.constant 0 : index
    %c0_21 = arith.constant 0 : index
    %23 = vector.load %arg16[%c0_20, %c0_21] : memref<8x32xf32, #tpu.memory_space<vmem>>, vector<8x32xf32>
    %24 = tpu.concatenate %22, %23 in 1 : vector<8x32xf32>, vector<8x32xf32> -> vector<8x64xf32>
    %cst_22 = arith.constant dense<0.000000e+00> : vector<8x194xf32>
    %25 = tpu.matmul %24, %12, %cst_22 {dimension_numbers = #tpu.dot_dimension_numbers<[1], [0], [0], [1], [0, 0, 1, 1], [], []>} : vector<8x64xf32>, vector<64x194xf32>, vector<8x194xf32> -> vector<8x194xf32>
    %26 = arith.addf %25, %15 : vector<8x194xf32>
    %27 = vector.extract_strided_slice %26 {offsets = [0, 0], sizes = [8, 96], strides = [1, 1]} : vector<8x194xf32> to vector<8x96xf32>
    %c0_23 = arith.constant 0 : index
    %c0_24 = arith.constant 0 : index
    %c0_25 = arith.constant 0 : index
    %28 = vector.load %arg13[%c0_23, %c0_24, %c0_25] : memref<4x8x96xf32, #tpu.memory_space<vmem>>, vector<1x8x96xf32>
    %29 = vector.shape_cast %28 : vector<1x8x96xf32> to vector<8x96xf32>
    %c0_26 = arith.constant 0 : index
    %c0_27 = arith.constant 0 : index
    %30 = vector.load %arg15[%c0_26, %c0_27] : memref<8x32xf32, #tpu.memory_space<vmem>>, vector<8x32xf32>
    %31 = vector.extract_strided_slice %29 {offsets = [0, 0], sizes = [8, 64], strides = [1, 1]} : vector<8x96xf32> to vector<8x64xf32>
    %32 = vector.extract_strided_slice %27 {offsets = [0, 0], sizes = [8, 64], strides = [1, 1]} : vector<8x96xf32> to vector<8x64xf32>
    %33 = arith.addf %31, %32 : vector<8x64xf32>
    %34 = arith.negf %33 : vector<8x64xf32>
    %35 = math.exp %34 : vector<8x64xf32>
    %cst_28 = arith.constant 1.000000e+00 : f32
    %36 = vector.broadcast %cst_28 : f32 to vector<8x64xf32>
    %37 = arith.addf %36, %35 : vector<8x64xf32>
    %38 = arith.divf %36, %37 : vector<8x64xf32>
    %39 = vector.extract_strided_slice %38 {offsets = [0, 0], sizes = [8, 32], strides = [1, 1]} : vector<8x64xf32> to vector<8x32xf32>
    %40 = vector.extract_strided_slice %38 {offsets = [0, 32], sizes = [8, 32], strides = [1, 1]} : vector<8x64xf32> to vector<8x32xf32>
    %41 = vector.extract_strided_slice %29 {offsets = [0, 64], sizes = [8, 32], strides = [1, 1]} : vector<8x96xf32> to vector<8x32xf32>
    %42 = vector.extract_strided_slice %27 {offsets = [0, 64], sizes = [8, 32], strides = [1, 1]} : vector<8x96xf32> to vector<8x32xf32>
    %43 = arith.mulf %39, %42 : vector<8x32xf32>
    %44 = arith.addf %41, %43 : vector<8x32xf32>
    %45 = math.tanh %44 : vector<8x32xf32>
    %cst_29 = arith.constant 1.000000e+00 : f32
    %46 = vector.broadcast %cst_29 : f32 to vector<8x32xf32>
    %47 = arith.subf %46, %40 : vector<8x32xf32>
    %48 = arith.mulf %47, %45 : vector<8x32xf32>
    %49 = arith.mulf %40, %30 : vector<8x32xf32>
    %50 = arith.addf %48, %49 : vector<8x32xf32>
    %c0_30 = arith.constant 0 : index
    %c0_31 = arith.constant 0 : index
    %51 = vector.load %arg16[%c0_30, %c0_31] : memref<8x32xf32, #tpu.memory_space<vmem>>, vector<8x32xf32>
    %c0_32 = arith.constant 0 : index
    %c0_33 = arith.constant 0 : index
    %52 = vector.load %arg17[%c0_32, %c0_33] : memref<8x1xf32, #tpu.memory_space<vmem>>, vector<8x1xf32>
    %c1_i32 = arith.constant 1 : i32
    %53 = tpu.concatenate %50, %51 in 1 : vector<8x32xf32>, vector<8x32xf32> -> vector<8x64xf32>
    %cst_34 = arith.constant dense<0.000000e+00> : vector<8x194xf32>
    %54 = tpu.matmul %53, %12, %cst_34 {dimension_numbers = #tpu.dot_dimension_numbers<[1], [0], [0], [1], [0, 0, 1, 1], [], []>} : vector<8x64xf32>, vector<64x194xf32>, vector<8x194xf32> -> vector<8x194xf32>
    %55 = arith.addf %54, %15 : vector<8x194xf32>
    %56 = vector.extract_strided_slice %55 {offsets = [0, 0], sizes = [8, 96], strides = [1, 1]} : vector<8x194xf32> to vector<8x96xf32>
    %57 = vector.extract_strided_slice %55 {offsets = [0, 96], sizes = [8, 2], strides = [1, 1]} : vector<8x194xf32> to vector<8x2xf32>
    %58 = vector.extract_strided_slice %55 {offsets = [0, 98], sizes = [8, 96], strides = [1, 1]} : vector<8x194xf32> to vector<8x96xf32>
    %c1_i32_35 = arith.constant 1 : i32
    %59 = arith.subi %c1_i32, %c1_i32_35 : i32
    %60 = arith.index_cast %59 : i32 to index
    %c0_36 = arith.constant 0 : index
    %c0_37 = arith.constant 0 : index
    %61 = vector.load %arg2[%60, %c0_36, %c0_37] : memref<4x8x1xf32, #tpu.memory_space<vmem>>, vector<1x8x1xf32>
    %62 = vector.shape_cast %61 : vector<1x8x1xf32> to vector<8x1xf32>
    %63 = vector.extract_strided_slice %57 {offsets = [0, 0], sizes = [8, 1], strides = [1, 1]} : vector<8x2xf32> to vector<8x1xf32>
    %64 = arith.negf %63 : vector<8x1xf32>
    %65 = math.exp %64 : vector<8x1xf32>
    %cst_38 = arith.constant 1.000000e+00 : f32
    %66 = vector.broadcast %cst_38 : f32 to vector<8x1xf32>
    %67 = arith.addf %66, %65 : vector<8x1xf32>
    %68 = arith.divf %66, %67 : vector<8x1xf32>
    %69 = vector.extract_strided_slice %57 {offsets = [0, 1], sizes = [8, 1], strides = [1, 1]} : vector<8x2xf32> to vector<8x1xf32>
    %70 = arith.negf %69 : vector<8x1xf32>
    %71 = math.exp %70 : vector<8x1xf32>
    %cst_39 = arith.constant 1.000000e+00 : f32
    %72 = vector.broadcast %cst_39 : f32 to vector<8x1xf32>
    %73 = arith.addf %72, %71 : vector<8x1xf32>
    %74 = arith.divf %72, %73 : vector<8x1xf32>
    %75 = vector.extract_strided_slice %57 {offsets = [0, 1], sizes = [8, 1], strides = [1, 1]} : vector<8x2xf32> to vector<8x1xf32>
    %cst_40 = arith.constant 0.000000e+00 : f32
    %76 = vector.broadcast %cst_40 : f32 to vector<8x1xf32>
    %77 = arith.subf %76, %75 : vector<8x1xf32>
    %cst_41 = arith.constant 0.000000e+00 : f32
    %78 = vector.broadcast %cst_41 : f32 to vector<8x1xf32>
    %79 = arith.maximumf %77, %78 : vector<8x1xf32>
    %80 = vector.broadcast %cst_41 : f32 to vector<8x1xf32>
    %81 = arith.subf %77, %80 : vector<8x1xf32>
    %82 = arith.cmpf one, %81, %81 : vector<8x1xf32>
    %83 = vector.broadcast %cst_41 : f32 to vector<8x1xf32>
    %84 = arith.addf %77, %83 : vector<8x1xf32>
    %85 = math.absf %81 : vector<8x1xf32>
    %cst_42 = arith.constant 0.000000e+00 : f32
    %86 = vector.broadcast %cst_42 : f32 to vector<8x1xf32>
    %87 = arith.subf %86, %85 : vector<8x1xf32>
    %88 = math.exp %87 : vector<8x1xf32>
    %89 = math.log1p %88 : vector<8x1xf32>
    %90 = arith.addf %79, %89 : vector<8x1xf32>
    %91 = arith.select %82, %84, %90 : vector<8x1xi1>, vector<8x1xf32>
    %cst_43 = arith.constant 0.000000e+00 : f32
    %92 = vector.broadcast %cst_43 : f32 to vector<8x1xf32>
    %93 = arith.subf %92, %91 : vector<8x1xf32>
    %cst_44 = arith.constant 0.000000e+00 : f32
    %94 = vector.broadcast %cst_44 : f32 to vector<8x1xf32>
    %95 = arith.subf %94, %93 : vector<8x1xf32>
    %96 = arith.mulf %74, %74 : vector<8x1xf32>
    %97 = arith.mulf %68, %68 : vector<8x1xf32>
    %98 = arith.addf %96, %97 : vector<8x1xf32>
    %cst_45 = arith.constant 5.000000e-01 : f32
    %99 = vector.broadcast %cst_45 : f32 to vector<8x1xf32>
    %100 = arith.mulf %99, %98 : vector<8x1xf32>
    %101 = arith.addf %95, %100 : vector<8x1xf32>
    %cst_46 = arith.constant 5.000000e-01 : f32
    %102 = vector.broadcast %cst_46 : f32 to vector<8x1xf32>
    %103 = arith.subf %101, %102 : vector<8x1xf32>
    %104 = arith.addf %52, %103 : vector<8x1xf32>
    %105 = arith.mulf %74, %62 : vector<8x1xf32>
    %106 = arith.addf %68, %105 : vector<8x1xf32>
    %107 = vector.broadcast %106 : vector<8x1xf32> to vector<8x96xf32>
    %108 = arith.mulf %107, %18 : vector<8x96xf32>
    %109 = arith.addf %108, %21 : vector<8x96xf32>
    %110 = vector.extract_strided_slice %109 {offsets = [0, 0], sizes = [8, 64], strides = [1, 1]} : vector<8x96xf32> to vector<8x64xf32>
    %111 = vector.extract_strided_slice %58 {offsets = [0, 0], sizes = [8, 64], strides = [1, 1]} : vector<8x96xf32> to vector<8x64xf32>
    %112 = arith.addf %110, %111 : vector<8x64xf32>
    %113 = arith.negf %112 : vector<8x64xf32>
    %114 = math.exp %113 : vector<8x64xf32>
    %cst_47 = arith.constant 1.000000e+00 : f32
    %115 = vector.broadcast %cst_47 : f32 to vector<8x64xf32>
    %116 = arith.addf %115, %114 : vector<8x64xf32>
    %117 = arith.divf %115, %116 : vector<8x64xf32>
    %118 = vector.extract_strided_slice %117 {offsets = [0, 0], sizes = [8, 32], strides = [1, 1]} : vector<8x64xf32> to vector<8x32xf32>
    %119 = vector.extract_strided_slice %117 {offsets = [0, 32], sizes = [8, 32], strides = [1, 1]} : vector<8x64xf32> to vector<8x32xf32>
    %120 = vector.extract_strided_slice %109 {offsets = [0, 64], sizes = [8, 32], strides = [1, 1]} : vector<8x96xf32> to vector<8x32xf32>
    %121 = vector.extract_strided_slice %58 {offsets = [0, 64], sizes = [8, 32], strides = [1, 1]} : vector<8x96xf32> to vector<8x32xf32>
    %122 = arith.mulf %118, %121 : vector<8x32xf32>
    %123 = arith.addf %120, %122 : vector<8x32xf32>
    %124 = math.tanh %123 : vector<8x32xf32>
    %cst_48 = arith.constant 1.000000e+00 : f32
    %125 = vector.broadcast %cst_48 : f32 to vector<8x32xf32>
    %126 = arith.subf %125, %119 : vector<8x32xf32>
    %127 = arith.mulf %126, %124 : vector<8x32xf32>
    %128 = arith.mulf %119, %51 : vector<8x32xf32>
    %129 = arith.addf %127, %128 : vector<8x32xf32>
    %c1_i32_49 = arith.constant 1 : i32
    %130 = arith.subi %c1_i32, %c1_i32_49 : i32
    %131 = arith.index_cast %130 : i32 to index
    %c0_50 = arith.constant 0 : index
    %c0_51 = arith.constant 0 : index
    %132 = vector.load %arg14[%131, %c0_50, %c0_51] : memref<4x8x32xf32, #tpu.memory_space<vmem>>, vector<1x8x32xf32>
    %133 = vector.shape_cast %132 : vector<1x8x32xf32> to vector<8x32xf32>
    %134 = vector.shape_cast %129 : vector<8x32xf32> to vector<1x8x32xf32>
    tpu.vector_store %arg14[%131, %c0_50, %c0_51], %134 {strides = array<i32>} : memref<4x8x32xf32, #tpu.memory_space<vmem>>, vector<1x8x32xf32>,
    %135 = arith.index_cast %c1_i32 : i32 to index
    %c0_52 = arith.constant 0 : index
    %c0_53 = arith.constant 0 : index
    %136 = vector.load %arg13[%135, %c0_52, %c0_53] : memref<4x8x96xf32, #tpu.memory_space<vmem>>, vector<1x8x96xf32>
    %137 = vector.shape_cast %136 : vector<1x8x96xf32> to vector<8x96xf32>
    %138 = vector.extract_strided_slice %137 {offsets = [0, 0], sizes = [8, 64], strides = [1, 1]} : vector<8x96xf32> to vector<8x64xf32>
    %139 = vector.extract_strided_slice %56 {offsets = [0, 0], sizes = [8, 64], strides = [1, 1]} : vector<8x96xf32> to vector<8x64xf32>
    %140 = arith.addf %138, %139 : vector<8x64xf32>
    %141 = arith.negf %140 : vector<8x64xf32>
    %142 = math.exp %141 : vector<8x64xf32>
    %cst_54 = arith.constant 1.000000e+00 : f32
    %143 = vector.broadcast %cst_54 : f32 to vector<8x64xf32>
    %144 = arith.addf %143, %142 : vector<8x64xf32>
    %145 = arith.divf %143, %144 : vector<8x64xf32>
    %146 = vector.extract_strided_slice %145 {offsets = [0, 0], sizes = [8, 32], strides = [1, 1]} : vector<8x64xf32> to vector<8x32xf32>
    %147 = vector.extract_strided_slice %145 {offsets = [0, 32], sizes = [8, 32], strides = [1, 1]} : vector<8x64xf32> to vector<8x32xf32>
    %148 = vector.extract_strided_slice %137 {offsets = [0, 64], sizes = [8, 32], strides = [1, 1]} : vector<8x96xf32> to vector<8x32xf32>
    %149 = vector.extract_strided_slice %56 {offsets = [0, 64], sizes = [8, 32], strides = [1, 1]} : vector<8x96xf32> to vector<8x32xf32>
    %150 = arith.mulf %146, %149 : vector<8x32xf32>
    %151 = arith.addf %148, %150 : vector<8x32xf32>
    %152 = math.tanh %151 : vector<8x32xf32>
    %cst_55 = arith.constant 1.000000e+00 : f32
    %153 = vector.broadcast %cst_55 : f32 to vector<8x32xf32>
    %154 = arith.subf %153, %147 : vector<8x32xf32>
    %155 = arith.mulf %154, %152 : vector<8x32xf32>
    %156 = arith.mulf %147, %50 : vector<8x32xf32>
    %157 = arith.addf %155, %156 : vector<8x32xf32>
    %c2_i32 = arith.constant 2 : i32
    %158 = tpu.concatenate %157, %129 in 1 : vector<8x32xf32>, vector<8x32xf32> -> vector<8x64xf32>
    %cst_56 = arith.constant dense<0.000000e+00> : vector<8x194xf32>
    %159 = tpu.matmul %158, %12, %cst_56 {dimension_numbers = #tpu.dot_dimension_numbers<[1], [0], [0], [1], [0, 0, 1, 1], [], []>} : vector<8x64xf32>, vector<64x194xf32>, vector<8x194xf32> -> vector<8x194xf32>
    %160 = arith.addf %159, %15 : vector<8x194xf32>
    %161 = vector.extract_strided_slice %160 {offsets = [0, 0], sizes = [8, 96], strides = [1, 1]} : vector<8x194xf32> to vector<8x96xf32>
    %162 = vector.extract_strided_slice %160 {offsets = [0, 96], sizes = [8, 2], strides = [1, 1]} : vector<8x194xf32> to vector<8x2xf32>
    %163 = vector.extract_strided_slice %160 {offsets = [0, 98], sizes = [8, 96], strides = [1, 1]} : vector<8x194xf32> to vector<8x96xf32>
    %c1_i32_57 = arith.constant 1 : i32
    %164 = arith.subi %c2_i32, %c1_i32_57 : i32
    %165 = arith.index_cast %164 : i32 to index
    %c0_58 = arith.constant 0 : index
    %c0_59 = arith.constant 0 : index
    %166 = vector.load %arg2[%165, %c0_58, %c0_59] : memref<4x8x1xf32, #tpu.memory_space<vmem>>, vector<1x8x1xf32>
    %167 = vector.shape_cast %166 : vector<1x8x1xf32> to vector<8x1xf32>
    %168 = vector.extract_strided_slice %162 {offsets = [0, 0], sizes = [8, 1], strides = [1, 1]} : vector<8x2xf32> to vector<8x1xf32>
    %169 = arith.negf %168 : vector<8x1xf32>
    %170 = math.exp %169 : vector<8x1xf32>
    %cst_60 = arith.constant 1.000000e+00 : f32
    %171 = vector.broadcast %cst_60 : f32 to vector<8x1xf32>
    %172 = arith.addf %171, %170 : vector<8x1xf32>
    %173 = arith.divf %171, %172 : vector<8x1xf32>
    %174 = vector.extract_strided_slice %162 {offsets = [0, 1], sizes = [8, 1], strides = [1, 1]} : vector<8x2xf32> to vector<8x1xf32>
    %175 = arith.negf %174 : vector<8x1xf32>
    %176 = math.exp %175 : vector<8x1xf32>
    %cst_61 = arith.constant 1.000000e+00 : f32
    %177 = vector.broadcast %cst_61 : f32 to vector<8x1xf32>
    %178 = arith.addf %177, %176 : vector<8x1xf32>
    %179 = arith.divf %177, %178 : vector<8x1xf32>
    %180 = vector.extract_strided_slice %162 {offsets = [0, 1], sizes = [8, 1], strides = [1, 1]} : vector<8x2xf32> to vector<8x1xf32>
    %cst_62 = arith.constant 0.000000e+00 : f32
    %181 = vector.broadcast %cst_62 : f32 to vector<8x1xf32>
    %182 = arith.subf %181, %180 : vector<8x1xf32>
    %cst_63 = arith.constant 0.000000e+00 : f32
    %183 = vector.broadcast %cst_63 : f32 to vector<8x1xf32>
    %184 = arith.maximumf %182, %183 : vector<8x1xf32>
    %185 = vector.broadcast %cst_63 : f32 to vector<8x1xf32>
    %186 = arith.subf %182, %185 : vector<8x1xf32>
    %187 = arith.cmpf one, %186, %186 : vector<8x1xf32>
    %188 = vector.broadcast %cst_63 : f32 to vector<8x1xf32>
    %189 = arith.addf %182, %188 : vector<8x1xf32>
    %190 = math.absf %186 : vector<8x1xf32>
    %cst_64 = arith.constant 0.000000e+00 : f32
    %191 = vector.broadcast %cst_64 : f32 to vector<8x1xf32>
    %192 = arith.subf %191, %190 : vector<8x1xf32>
    %193 = math.exp %192 : vector<8x1xf32>
    %194 = math.log1p %193 : vector<8x1xf32>
    %195 = arith.addf %184, %194 : vector<8x1xf32>
    %196 = arith.select %187, %189, %195 : vector<8x1xi1>, vector<8x1xf32>
    %cst_65 = arith.constant 0.000000e+00 : f32
    %197 = vector.broadcast %cst_65 : f32 to vector<8x1xf32>
    %198 = arith.subf %197, %196 : vector<8x1xf32>
    %cst_66 = arith.constant 0.000000e+00 : f32
    %199 = vector.broadcast %cst_66 : f32 to vector<8x1xf32>
    %200 = arith.subf %199, %198 : vector<8x1xf32>
    %201 = arith.mulf %179, %179 : vector<8x1xf32>
    %202 = arith.mulf %173, %173 : vector<8x1xf32>
    %203 = arith.addf %201, %202 : vector<8x1xf32>
    %cst_67 = arith.constant 5.000000e-01 : f32
    %204 = vector.broadcast %cst_67 : f32 to vector<8x1xf32>
    %205 = arith.mulf %204, %203 : vector<8x1xf32>
    %206 = arith.addf %200, %205 : vector<8x1xf32>
    %cst_68 = arith.constant 5.000000e-01 : f32
    %207 = vector.broadcast %cst_68 : f32 to vector<8x1xf32>
    %208 = arith.subf %206, %207 : vector<8x1xf32>
    %209 = arith.addf %104, %208 : vector<8x1xf32>
    %210 = arith.mulf %179, %167 : vector<8x1xf32>
    %211 = arith.addf %173, %210 : vector<8x1xf32>
    %212 = vector.broadcast %211 : vector<8x1xf32> to vector<8x96xf32>
    %213 = arith.mulf %212, %18 : vector<8x96xf32>
    %214 = arith.addf %213, %21 : vector<8x96xf32>
    %215 = vector.extract_strided_slice %214 {offsets = [0, 0], sizes = [8, 64], strides = [1, 1]} : vector<8x96xf32> to vector<8x64xf32>
    %216 = vector.extract_strided_slice %163 {offsets = [0, 0], sizes = [8, 64], strides = [1, 1]} : vector<8x96xf32> to vector<8x64xf32>
    %217 = arith.addf %215, %216 : vector<8x64xf32>
    %218 = arith.negf %217 : vector<8x64xf32>
    %219 = math.exp %218 : vector<8x64xf32>
    %cst_69 = arith.constant 1.000000e+00 : f32
    %220 = vector.broadcast %cst_69 : f32 to vector<8x64xf32>
    %221 = arith.addf %220, %219 : vector<8x64xf32>
    %222 = arith.divf %220, %221 : vector<8x64xf32>
    %223 = vector.extract_strided_slice %222 {offsets = [0, 0], sizes = [8, 32], strides = [1, 1]} : vector<8x64xf32> to vector<8x32xf32>
    %224 = vector.extract_strided_slice %222 {offsets = [0, 32], sizes = [8, 32], strides = [1, 1]} : vector<8x64xf32> to vector<8x32xf32>
    %225 = vector.extract_strided_slice %214 {offsets = [0, 64], sizes = [8, 32], strides = [1, 1]} : vector<8x96xf32> to vector<8x32xf32>
    %226 = vector.extract_strided_slice %163 {offsets = [0, 64], sizes = [8, 32], strides = [1, 1]} : vector<8x96xf32> to vector<8x32xf32>
    %227 = arith.mulf %223, %226 : vector<8x32xf32>
    %228 = arith.addf %225, %227 : vector<8x32xf32>
    %229 = math.tanh %228 : vector<8x32xf32>
    %cst_70 = arith.constant 1.000000e+00 : f32
    %230 = vector.broadcast %cst_70 : f32 to vector<8x32xf32>
    %231 = arith.subf %230, %224 : vector<8x32xf32>
    %232 = arith.mulf %231, %229 : vector<8x32xf32>
    %233 = arith.mulf %224, %129 : vector<8x32xf32>
    %234 = arith.addf %232, %233 : vector<8x32xf32>
    %c1_i32_71 = arith.constant 1 : i32
    %235 = arith.subi %c2_i32, %c1_i32_71 : i32
    %236 = arith.index_cast %235 : i32 to index
    %c0_72 = arith.constant 0 : index
    %c0_73 = arith.constant 0 : index
    %237 = vector.load %arg14[%236, %c0_72, %c0_73] : memref<4x8x32xf32, #tpu.memory_space<vmem>>, vector<1x8x32xf32>
    %238 = vector.shape_cast %237 : vector<1x8x32xf32> to vector<8x32xf32>
    %239 = vector.shape_cast %234 : vector<8x32xf32> to vector<1x8x32xf32>
    tpu.vector_store %arg14[%236, %c0_72, %c0_73], %239 {strides = array<i32>} : memref<4x8x32xf32, #tpu.memory_space<vmem>>, vector<1x8x32xf32>,
    %240 = arith.index_cast %c2_i32 : i32 to index
    %c0_74 = arith.constant 0 : index
    %c0_75 = arith.constant 0 : index
    %241 = vector.load %arg13[%240, %c0_74, %c0_75] : memref<4x8x96xf32, #tpu.memory_space<vmem>>, vector<1x8x96xf32>
    %242 = vector.shape_cast %241 : vector<1x8x96xf32> to vector<8x96xf32>
    %243 = vector.extract_strided_slice %242 {offsets = [0, 0], sizes = [8, 64], strides = [1, 1]} : vector<8x96xf32> to vector<8x64xf32>
    %244 = vector.extract_strided_slice %161 {offsets = [0, 0], sizes = [8, 64], strides = [1, 1]} : vector<8x96xf32> to vector<8x64xf32>
    %245 = arith.addf %243, %244 : vector<8x64xf32>
    %246 = arith.negf %245 : vector<8x64xf32>
    %247 = math.exp %246 : vector<8x64xf32>
    %cst_76 = arith.constant 1.000000e+00 : f32
    %248 = vector.broadcast %cst_76 : f32 to vector<8x64xf32>
    %249 = arith.addf %248, %247 : vector<8x64xf32>
    %250 = arith.divf %248, %249 : vector<8x64xf32>
    %251 = vector.extract_strided_slice %250 {offsets = [0, 0], sizes = [8, 32], strides = [1, 1]} : vector<8x64xf32> to vector<8x32xf32>
    %252 = vector.extract_strided_slice %250 {offsets = [0, 32], sizes = [8, 32], strides = [1, 1]} : vector<8x64xf32> to vector<8x32xf32>
    %253 = vector.extract_strided_slice %242 {offsets = [0, 64], sizes = [8, 32], strides = [1, 1]} : vector<8x96xf32> to vector<8x32xf32>
    %254 = vector.extract_strided_slice %161 {offsets = [0, 64], sizes = [8, 32], strides = [1, 1]} : vector<8x96xf32> to vector<8x32xf32>
    %255 = arith.mulf %251, %254 : vector<8x32xf32>
    %256 = arith.addf %253, %255 : vector<8x32xf32>
    %257 = math.tanh %256 : vector<8x32xf32>
    %cst_77 = arith.constant 1.000000e+00 : f32
    %258 = vector.broadcast %cst_77 : f32 to vector<8x32xf32>
    %259 = arith.subf %258, %252 : vector<8x32xf32>
    %260 = arith.mulf %259, %257 : vector<8x32xf32>
    %261 = arith.mulf %252, %157 : vector<8x32xf32>
    %262 = arith.addf %260, %261 : vector<8x32xf32>
    %c3_i32 = arith.constant 3 : i32
    %263 = tpu.concatenate %262, %234 in 1 : vector<8x32xf32>, vector<8x32xf32> -> vector<8x64xf32>
    %cst_78 = arith.constant dense<0.000000e+00> : vector<8x194xf32>
    %264 = tpu.matmul %263, %12, %cst_78 {dimension_numbers = #tpu.dot_dimension_numbers<[1], [0], [0], [1], [0, 0, 1, 1], [], []>} : vector<8x64xf32>, vector<64x194xf32>, vector<8x194xf32> -> vector<8x194xf32>
    %265 = arith.addf %264, %15 : vector<8x194xf32>
    %266 = vector.extract_strided_slice %265 {offsets = [0, 0], sizes = [8, 96], strides = [1, 1]} : vector<8x194xf32> to vector<8x96xf32>
    %267 = vector.extract_strided_slice %265 {offsets = [0, 96], sizes = [8, 2], strides = [1, 1]} : vector<8x194xf32> to vector<8x2xf32>
    %268 = vector.extract_strided_slice %265 {offsets = [0, 98], sizes = [8, 96], strides = [1, 1]} : vector<8x194xf32> to vector<8x96xf32>
    %c1_i32_79 = arith.constant 1 : i32
    %269 = arith.subi %c3_i32, %c1_i32_79 : i32
    %270 = arith.index_cast %269 : i32 to index
    %c0_80 = arith.constant 0 : index
    %c0_81 = arith.constant 0 : index
    %271 = vector.load %arg2[%270, %c0_80, %c0_81] : memref<4x8x1xf32, #tpu.memory_space<vmem>>, vector<1x8x1xf32>
    %272 = vector.shape_cast %271 : vector<1x8x1xf32> to vector<8x1xf32>
    %273 = vector.extract_strided_slice %267 {offsets = [0, 0], sizes = [8, 1], strides = [1, 1]} : vector<8x2xf32> to vector<8x1xf32>
    %274 = arith.negf %273 : vector<8x1xf32>
    %275 = math.exp %274 : vector<8x1xf32>
    %cst_82 = arith.constant 1.000000e+00 : f32
    %276 = vector.broadcast %cst_82 : f32 to vector<8x1xf32>
    %277 = arith.addf %276, %275 : vector<8x1xf32>
    %278 = arith.divf %276, %277 : vector<8x1xf32>
    %279 = vector.extract_strided_slice %267 {offsets = [0, 1], sizes = [8, 1], strides = [1, 1]} : vector<8x2xf32> to vector<8x1xf32>
    %280 = arith.negf %279 : vector<8x1xf32>
    %281 = math.exp %280 : vector<8x1xf32>
    %cst_83 = arith.constant 1.000000e+00 : f32
    %282 = vector.broadcast %cst_83 : f32 to vector<8x1xf32>
    %283 = arith.addf %282, %281 : vector<8x1xf32>
    %284 = arith.divf %282, %283 : vector<8x1xf32>
    %285 = vector.extract_strided_slice %267 {offsets = [0, 1], sizes = [8, 1], strides = [1, 1]} : vector<8x2xf32> to vector<8x1xf32>
    %cst_84 = arith.constant 0.000000e+00 : f32
    %286 = vector.broadcast %cst_84 : f32 to vector<8x1xf32>
    %287 = arith.subf %286, %285 : vector<8x1xf32>
    %cst_85 = arith.constant 0.000000e+00 : f32
    %288 = vector.broadcast %cst_85 : f32 to vector<8x1xf32>
    %289 = arith.maximumf %287, %288 : vector<8x1xf32>
    %290 = vector.broadcast %cst_85 : f32 to vector<8x1xf32>
    %291 = arith.subf %287, %290 : vector<8x1xf32>
    %292 = arith.cmpf one, %291, %291 : vector<8x1xf32>
    %293 = vector.broadcast %cst_85 : f32 to vector<8x1xf32>
    %294 = arith.addf %287, %293 : vector<8x1xf32>
    %295 = math.absf %291 : vector<8x1xf32>
    %cst_86 = arith.constant 0.000000e+00 : f32
    %296 = vector.broadcast %cst_86 : f32 to vector<8x1xf32>
    %297 = arith.subf %296, %295 : vector<8x1xf32>
    %298 = math.exp %297 : vector<8x1xf32>
    %299 = math.log1p %298 : vector<8x1xf32>
    %300 = arith.addf %289, %299 : vector<8x1xf32>
    %301 = arith.select %292, %294, %300 : vector<8x1xi1>, vector<8x1xf32>
    %cst_87 = arith.constant 0.000000e+00 : f32
    %302 = vector.broadcast %cst_87 : f32 to vector<8x1xf32>
    %303 = arith.subf %302, %301 : vector<8x1xf32>
    %cst_88 = arith.constant 0.000000e+00 : f32
    %304 = vector.broadcast %cst_88 : f32 to vector<8x1xf32>
    %305 = arith.subf %304, %303 : vector<8x1xf32>
    %306 = arith.mulf %284, %284 : vector<8x1xf32>
    %307 = arith.mulf %278, %278 : vector<8x1xf32>
    %308 = arith.addf %306, %307 : vector<8x1xf32>
    %cst_89 = arith.constant 5.000000e-01 : f32
    %309 = vector.broadcast %cst_89 : f32 to vector<8x1xf32>
    %310 = arith.mulf %309, %308 : vector<8x1xf32>
    %311 = arith.addf %305, %310 : vector<8x1xf32>
    %cst_90 = arith.constant 5.000000e-01 : f32
    %312 = vector.broadcast %cst_90 : f32 to vector<8x1xf32>
    %313 = arith.subf %311, %312 : vector<8x1xf32>
    %314 = arith.addf %209, %313 : vector<8x1xf32>
    %315 = arith.mulf %284, %272 : vector<8x1xf32>
    %316 = arith.addf %278, %315 : vector<8x1xf32>
    %317 = vector.broadcast %316 : vector<8x1xf32> to vector<8x96xf32>
    %318 = arith.mulf %317, %18 : vector<8x96xf32>
    %319 = arith.addf %318, %21 : vector<8x96xf32>
    %320 = vector.extract_strided_slice %319 {offsets = [0, 0], sizes = [8, 64], strides = [1, 1]} : vector<8x96xf32> to vector<8x64xf32>
    %321 = vector.extract_strided_slice %268 {offsets = [0, 0], sizes = [8, 64], strides = [1, 1]} : vector<8x96xf32> to vector<8x64xf32>
    %322 = arith.addf %320, %321 : vector<8x64xf32>
    %323 = arith.negf %322 : vector<8x64xf32>
    %324 = math.exp %323 : vector<8x64xf32>
    %cst_91 = arith.constant 1.000000e+00 : f32
    %325 = vector.broadcast %cst_91 : f32 to vector<8x64xf32>
    %326 = arith.addf %325, %324 : vector<8x64xf32>
    %327 = arith.divf %325, %326 : vector<8x64xf32>
    %328 = vector.extract_strided_slice %327 {offsets = [0, 0], sizes = [8, 32], strides = [1, 1]} : vector<8x64xf32> to vector<8x32xf32>
    %329 = vector.extract_strided_slice %327 {offsets = [0, 32], sizes = [8, 32], strides = [1, 1]} : vector<8x64xf32> to vector<8x32xf32>
    %330 = vector.extract_strided_slice %319 {offsets = [0, 64], sizes = [8, 32], strides = [1, 1]} : vector<8x96xf32> to vector<8x32xf32>
    %331 = vector.extract_strided_slice %268 {offsets = [0, 64], sizes = [8, 32], strides = [1, 1]} : vector<8x96xf32> to vector<8x32xf32>
    %332 = arith.mulf %328, %331 : vector<8x32xf32>
    %333 = arith.addf %330, %332 : vector<8x32xf32>
    %334 = math.tanh %333 : vector<8x32xf32>
    %cst_92 = arith.constant 1.000000e+00 : f32
    %335 = vector.broadcast %cst_92 : f32 to vector<8x32xf32>
    %336 = arith.subf %335, %329 : vector<8x32xf32>
    %337 = arith.mulf %336, %334 : vector<8x32xf32>
    %338 = arith.mulf %329, %234 : vector<8x32xf32>
    %339 = arith.addf %337, %338 : vector<8x32xf32>
    %c1_i32_93 = arith.constant 1 : i32
    %340 = arith.subi %c3_i32, %c1_i32_93 : i32
    %341 = arith.index_cast %340 : i32 to index
    %c0_94 = arith.constant 0 : index
    %c0_95 = arith.constant 0 : index
    %342 = vector.load %arg14[%341, %c0_94, %c0_95] : memref<4x8x32xf32, #tpu.memory_space<vmem>>, vector<1x8x32xf32>
    %343 = vector.shape_cast %342 : vector<1x8x32xf32> to vector<8x32xf32>
    %344 = vector.shape_cast %339 : vector<8x32xf32> to vector<1x8x32xf32>
    tpu.vector_store %arg14[%341, %c0_94, %c0_95], %344 {strides = array<i32>} : memref<4x8x32xf32, #tpu.memory_space<vmem>>, vector<1x8x32xf32>,
    %345 = arith.index_cast %c3_i32 : i32 to index
    %c0_96 = arith.constant 0 : index
    %c0_97 = arith.constant 0 : index
    %346 = vector.load %arg13[%345, %c0_96, %c0_97] : memref<4x8x96xf32, #tpu.memory_space<vmem>>, vector<1x8x96xf32>
    %347 = vector.shape_cast %346 : vector<1x8x96xf32> to vector<8x96xf32>
    %348 = vector.extract_strided_slice %347 {offsets = [0, 0], sizes = [8, 64], strides = [1, 1]} : vector<8x96xf32> to vector<8x64xf32>
    %349 = vector.extract_strided_slice %266 {offsets = [0, 0], sizes = [8, 64], strides = [1, 1]} : vector<8x96xf32> to vector<8x64xf32>
    %350 = arith.addf %348, %349 : vector<8x64xf32>
    %351 = arith.negf %350 : vector<8x64xf32>
    %352 = math.exp %351 : vector<8x64xf32>
    %cst_98 = arith.constant 1.000000e+00 : f32
    %353 = vector.broadcast %cst_98 : f32 to vector<8x64xf32>
    %354 = arith.addf %353, %352 : vector<8x64xf32>
    %355 = arith.divf %353, %354 : vector<8x64xf32>
    %356 = vector.extract_strided_slice %355 {offsets = [0, 0], sizes = [8, 32], strides = [1, 1]} : vector<8x64xf32> to vector<8x32xf32>
    %357 = vector.extract_strided_slice %355 {offsets = [0, 32], sizes = [8, 32], strides = [1, 1]} : vector<8x64xf32> to vector<8x32xf32>
    %358 = vector.extract_strided_slice %347 {offsets = [0, 64], sizes = [8, 32], strides = [1, 1]} : vector<8x96xf32> to vector<8x32xf32>
    %359 = vector.extract_strided_slice %266 {offsets = [0, 64], sizes = [8, 32], strides = [1, 1]} : vector<8x96xf32> to vector<8x32xf32>
    %360 = arith.mulf %356, %359 : vector<8x32xf32>
    %361 = arith.addf %358, %360 : vector<8x32xf32>
    %362 = math.tanh %361 : vector<8x32xf32>
    %cst_99 = arith.constant 1.000000e+00 : f32
    %363 = vector.broadcast %cst_99 : f32 to vector<8x32xf32>
    %364 = arith.subf %363, %357 : vector<8x32xf32>
    %365 = arith.mulf %364, %362 : vector<8x32xf32>
    %366 = arith.mulf %357, %262 : vector<8x32xf32>
    %367 = arith.addf %365, %366 : vector<8x32xf32>
    %c3_i32_100 = arith.constant 3 : i32
    %368 = tpu.concatenate %367, %339 in 1 : vector<8x32xf32>, vector<8x32xf32> -> vector<8x64xf32>
    %cst_101 = arith.constant dense<0.000000e+00> : vector<8x194xf32>
    %369 = tpu.matmul %368, %12, %cst_101 {dimension_numbers = #tpu.dot_dimension_numbers<[1], [0], [0], [1], [0, 0, 1, 1], [], []>} : vector<8x64xf32>, vector<64x194xf32>, vector<8x194xf32> -> vector<8x194xf32>
    %370 = arith.addf %369, %15 : vector<8x194xf32>
    %371 = vector.extract_strided_slice %370 {offsets = [0, 96], sizes = [8, 2], strides = [1, 1]} : vector<8x194xf32> to vector<8x2xf32>
    %372 = vector.extract_strided_slice %370 {offsets = [0, 98], sizes = [8, 96], strides = [1, 1]} : vector<8x194xf32> to vector<8x96xf32>
    %c3 = arith.constant 3 : index
    %c0_102 = arith.constant 0 : index
    %c0_103 = arith.constant 0 : index
    %373 = vector.load %arg2[%c3, %c0_102, %c0_103] : memref<4x8x1xf32, #tpu.memory_space<vmem>>, vector<1x8x1xf32>
    %374 = vector.shape_cast %373 : vector<1x8x1xf32> to vector<8x1xf32>
    %375 = vector.extract_strided_slice %371 {offsets = [0, 0], sizes = [8, 1], strides = [1, 1]} : vector<8x2xf32> to vector<8x1xf32>
    %376 = arith.negf %375 : vector<8x1xf32>
    %377 = math.exp %376 : vector<8x1xf32>
    %cst_104 = arith.constant 1.000000e+00 : f32
    %378 = vector.broadcast %cst_104 : f32 to vector<8x1xf32>
    %379 = arith.addf %378, %377 : vector<8x1xf32>
    %380 = arith.divf %378, %379 : vector<8x1xf32>
    %381 = vector.extract_strided_slice %371 {offsets = [0, 1], sizes = [8, 1], strides = [1, 1]} : vector<8x2xf32> to vector<8x1xf32>
    %382 = arith.negf %381 : vector<8x1xf32>
    %383 = math.exp %382 : vector<8x1xf32>
    %cst_105 = arith.constant 1.000000e+00 : f32
    %384 = vector.broadcast %cst_105 : f32 to vector<8x1xf32>
    %385 = arith.addf %384, %383 : vector<8x1xf32>
    %386 = arith.divf %384, %385 : vector<8x1xf32>
    %387 = vector.extract_strided_slice %371 {offsets = [0, 1], sizes = [8, 1], strides = [1, 1]} : vector<8x2xf32> to vector<8x1xf32>
    %cst_106 = arith.constant 0.000000e+00 : f32
    %388 = vector.broadcast %cst_106 : f32 to vector<8x1xf32>
    %389 = arith.subf %388, %387 : vector<8x1xf32>
    %cst_107 = arith.constant 0.000000e+00 : f32
    %390 = vector.broadcast %cst_107 : f32 to vector<8x1xf32>
    %391 = arith.maximumf %389, %390 : vector<8x1xf32>
    %392 = vector.broadcast %cst_107 : f32 to vector<8x1xf32>
    %393 = arith.subf %389, %392 : vector<8x1xf32>
    %394 = arith.cmpf one, %393, %393 : vector<8x1xf32>
    %395 = vector.broadcast %cst_107 : f32 to vector<8x1xf32>
    %396 = arith.addf %389, %395 : vector<8x1xf32>
    %397 = math.absf %393 : vector<8x1xf32>
    %cst_108 = arith.constant 0.000000e+00 : f32
    %398 = vector.broadcast %cst_108 : f32 to vector<8x1xf32>
    %399 = arith.subf %398, %397 : vector<8x1xf32>
    %400 = math.exp %399 : vector<8x1xf32>
    %401 = math.log1p %400 : vector<8x1xf32>
    %402 = arith.addf %391, %401 : vector<8x1xf32>
    %403 = arith.select %394, %396, %402 : vector<8x1xi1>, vector<8x1xf32>
    %cst_109 = arith.constant 0.000000e+00 : f32
    %404 = vector.broadcast %cst_109 : f32 to vector<8x1xf32>
    %405 = arith.subf %404, %403 : vector<8x1xf32>
    %cst_110 = arith.constant 0.000000e+00 : f32
    %406 = vector.broadcast %cst_110 : f32 to vector<8x1xf32>
    %407 = arith.subf %406, %405 : vector<8x1xf32>
    %408 = arith.mulf %386, %386 : vector<8x1xf32>
    %409 = arith.mulf %380, %380 : vector<8x1xf32>
    %410 = arith.addf %408, %409 : vector<8x1xf32>
    %cst_111 = arith.constant 5.000000e-01 : f32
    %411 = vector.broadcast %cst_111 : f32 to vector<8x1xf32>
    %412 = arith.mulf %411, %410 : vector<8x1xf32>
    %413 = arith.addf %407, %412 : vector<8x1xf32>
    %cst_112 = arith.constant 5.000000e-01 : f32
    %414 = vector.broadcast %cst_112 : f32 to vector<8x1xf32>
    %415 = arith.subf %413, %414 : vector<8x1xf32>
    %416 = arith.addf %314, %415 : vector<8x1xf32>
    %417 = arith.mulf %386, %374 : vector<8x1xf32>
    %418 = arith.addf %380, %417 : vector<8x1xf32>
    %419 = vector.broadcast %418 : vector<8x1xf32> to vector<8x96xf32>
    %420 = arith.mulf %419, %18 : vector<8x96xf32>
    %421 = arith.addf %420, %21 : vector<8x96xf32>
    %422 = vector.extract_strided_slice %421 {offsets = [0, 0], sizes = [8, 64], strides = [1, 1]} : vector<8x96xf32> to vector<8x64xf32>
    %423 = vector.extract_strided_slice %372 {offsets = [0, 0], sizes = [8, 64], strides = [1, 1]} : vector<8x96xf32> to vector<8x64xf32>
    %424 = arith.addf %422, %423 : vector<8x64xf32>
    %425 = arith.negf %424 : vector<8x64xf32>
    %426 = math.exp %425 : vector<8x64xf32>
    %cst_113 = arith.constant 1.000000e+00 : f32
    %427 = vector.broadcast %cst_113 : f32 to vector<8x64xf32>
    %428 = arith.addf %427, %426 : vector<8x64xf32>
    %429 = arith.divf %427, %428 : vector<8x64xf32>
    %430 = vector.extract_strided_slice %429 {offsets = [0, 0], sizes = [8, 32], strides = [1, 1]} : vector<8x64xf32> to vector<8x32xf32>
    %431 = vector.extract_strided_slice %429 {offsets = [0, 32], sizes = [8, 32], strides = [1, 1]} : vector<8x64xf32> to vector<8x32xf32>
    %432 = vector.extract_strided_slice %421 {offsets = [0, 64], sizes = [8, 32], strides = [1, 1]} : vector<8x96xf32> to vector<8x32xf32>
    %433 = vector.extract_strided_slice %372 {offsets = [0, 64], sizes = [8, 32], strides = [1, 1]} : vector<8x96xf32> to vector<8x32xf32>
    %434 = arith.mulf %430, %433 : vector<8x32xf32>
    %435 = arith.addf %432, %434 : vector<8x32xf32>
    %436 = math.tanh %435 : vector<8x32xf32>
    %cst_114 = arith.constant 1.000000e+00 : f32
    %437 = vector.broadcast %cst_114 : f32 to vector<8x32xf32>
    %438 = arith.subf %437, %431 : vector<8x32xf32>
    %439 = arith.mulf %438, %436 : vector<8x32xf32>
    %440 = arith.mulf %431, %339 : vector<8x32xf32>
    %441 = arith.addf %439, %440 : vector<8x32xf32>
    %c3_115 = arith.constant 3 : index
    %c0_116 = arith.constant 0 : index
    %c0_117 = arith.constant 0 : index
    %442 = vector.load %arg14[%c3_115, %c0_116, %c0_117] : memref<4x8x32xf32, #tpu.memory_space<vmem>>, vector<1x8x32xf32>
    %443 = vector.shape_cast %442 : vector<1x8x32xf32> to vector<8x32xf32>
    %444 = vector.shape_cast %441 : vector<8x32xf32> to vector<1x8x32xf32>
    tpu.vector_store %arg14[%c3_115, %c0_116, %c0_117], %444 {strides = array<i32>} : memref<4x8x32xf32, #tpu.memory_space<vmem>>, vector<1x8x32xf32>,
    %c0_118 = arith.constant 0 : index
    %c0_119 = arith.constant 0 : index
    %445 = vector.load %arg15[%c0_118, %c0_119] : memref<8x32xf32, #tpu.memory_space<vmem>>, vector<8x32xf32>
    tpu.vector_store %arg15[%c0_118, %c0_119], %367 {strides = array<i32>} : memref<8x32xf32, #tpu.memory_space<vmem>>, vector<8x32xf32>,
    %c0_120 = arith.constant 0 : index
    %c0_121 = arith.constant 0 : index
    %446 = vector.load %arg16[%c0_120, %c0_121] : memref<8x32xf32, #tpu.memory_space<vmem>>, vector<8x32xf32>
    tpu.vector_store %arg16[%c0_120, %c0_121], %441 {strides = array<i32>} : memref<8x32xf32, #tpu.memory_space<vmem>>, vector<8x32xf32>,
    %c0_122 = arith.constant 0 : index
    %c0_123 = arith.constant 0 : index
    %447 = vector.load %arg17[%c0_122, %c0_123] : memref<8x1xf32, #tpu.memory_space<vmem>>, vector<8x1xf32>
    tpu.vector_store %arg17[%c0_122, %c0_123], %416 {strides = array<i32>} : memref<8x1xf32, #tpu.memory_space<vmem>>, vector<8x1xf32>,
    %c0_124 = arith.constant 0 : index
    %c0_125 = arith.constant 0 : index
    %c0_126 = arith.constant 0 : index
    %448 = vector.load %arg14[%c0_124, %c0_125, %c0_126] : memref<4x8x32xf32, #tpu.memory_space<vmem>>, vector<4x8x32xf32>
    %449 = vector.shape_cast %448 : vector<4x8x32xf32> to vector<32x32xf32>
    %c0_127 = arith.constant 0 : index
    %c0_128 = arith.constant 0 : index
    %450 = vector.load %arg9[%c0_127, %c0_128] : memref<32x128xf32, #tpu.memory_space<vmem>>, vector<32x128xf32>
    %cst_129 = arith.constant dense<0.000000e+00> : vector<32x128xf32>
    %451 = tpu.matmul %449, %450, %cst_129 {dimension_numbers = #tpu.dot_dimension_numbers<[1], [0], [0], [1], [0, 0, 1, 1], [], []>} : vector<32x32xf32>, vector<32x128xf32>, vector<32x128xf32> -> vector<32x128xf32>
    %c0_130 = arith.constant 0 : index
    %c0_131 = arith.constant 0 : index
    %452 = vector.load %arg10[%c0_130, %c0_131] : memref<1x128xf32, #tpu.memory_space<vmem>>, vector<1x128xf32>
    %453 = vector.broadcast %452 : vector<1x128xf32> to vector<32x128xf32>
    %454 = arith.addf %451, %453 : vector<32x128xf32>
    %455 = vector.shape_cast %454 : vector<32x128xf32> to vector<4x8x128xf32>
    %c0_132 = arith.constant 0 : index
    %c0_133 = arith.constant 0 : index
    %c0_134 = arith.constant 0 : index
    %456 = vector.load %arg11[%c0_132, %c0_133, %c0_134] : memref<4x8x128xf32, #tpu.memory_space<vmem>>, vector<4x8x128xf32>
    tpu.vector_store %arg11[%c0_132, %c0_133, %c0_134], %455 {strides = array<i32>} : memref<4x8x128xf32, #tpu.memory_space<vmem>>, vector<4x8x128xf32>,
    %c1_i32_135 = arith.constant 1 : i32
    %457 = arith.cmpi eq, %arg0, %c1_i32_135 : i32
    %458 = arith.extui %457 : i1 to i32
    %c0_i32_136 = arith.constant 0 : i32
    %459 = arith.cmpi ne, %458, %c0_i32_136 : i32
    scf.if %459 {
      %460 = vector.extract_strided_slice %416 {offsets = [0, 0], sizes = [2, 1], strides = [1, 1]} : vector<8x1xf32> to vector<2x1xf32>
      %461 = vector.shape_cast %460 : vector<2x1xf32> to vector<1x2x1xf32>
      %cst_137 = arith.constant dense<0.000000e+00> : vector<1xf32>
      %462 = vector.multi_reduction <add>, %461, %cst_137 [1, 2] : vector<1x2x1xf32> to vector<1xf32>
      %463 = vector.shape_cast %462 : vector<1xf32> to vector<1x1x1xf32>
      %464 = vector.extract %463[0, 0, 0] : f32 from vector<1x1x1xf32>
      %cst_138 = arith.constant 6.250000e-02 : f32
      %465 = arith.mulf %464, %cst_138 : f32
      %466 = vector.broadcast %465 : f32 to vector<1x1xf32>
      %c0_139 = arith.constant 0 : index
      %c0_140 = arith.constant 0 : index
      %467 = vector.load %arg12[%c0_139, %c0_140] : memref<1x1xf32, #tpu.memory_space<vmem>>, vector<1x1xf32>
      tpu.vector_store %arg12[%c0_139, %c0_140], %466 {strides = array<i32>} : memref<1x1xf32, #tpu.memory_space<vmem>>, vector<1x1xf32>,
    } else {
    }
    return
  }
  func.func @transform_0(%arg0: i32) -> (i32, i32, i32) {
    %c0_i32 = arith.constant 0 : i32
    %c0_i32_0 = arith.constant 0 : i32
    %c0_i32_1 = arith.constant 0 : i32
    return %arg0, %c0_i32, %c0_i32_0 : i32, i32, i32
  }
  func.func @transform_1(%arg0: i32) -> (i32, i32, i32) {
    %c0_i32 = arith.constant 0 : i32
    %c0_i32_0 = arith.constant 0 : i32
    %c0_i32_1 = arith.constant 0 : i32
    return %arg0, %c0_i32, %c0_i32_0 : i32, i32, i32
  }
  func.func @transform_2(%arg0: i32) -> (i32, i32) {
    %c0_i32 = arith.constant 0 : i32
    %c0_i32_0 = arith.constant 0 : i32
    %c0_i32_1 = arith.constant 0 : i32
    return %c0_i32, %c0_i32_0 : i32, i32
  }
  func.func @transform_3(%arg0: i32) -> (i32, i32) {
    %c0_i32 = arith.constant 0 : i32
    %c0_i32_0 = arith.constant 0 : i32
    %c0_i32_1 = arith.constant 0 : i32
    return %c0_i32, %c0_i32_0 : i32, i32
  }
  func.func @transform_4(%arg0: i32) -> (i32, i32) {
    %c0_i32 = arith.constant 0 : i32
    %c0_i32_0 = arith.constant 0 : i32
    %c0_i32_1 = arith.constant 0 : i32
    return %c0_i32, %c0_i32_0 : i32, i32
  }
  func.func @transform_5(%arg0: i32) -> (i32, i32) {
    %c0_i32 = arith.constant 0 : i32
    %c0_i32_0 = arith.constant 0 : i32
    %c0_i32_1 = arith.constant 0 : i32
    return %c0_i32, %c0_i32_0 : i32, i32
  }
  func.func @transform_6(%arg0: i32) -> (i32, i32) {
    %c0_i32 = arith.constant 0 : i32
    %c0_i32_0 = arith.constant 0 : i32
    %c0_i32_1 = arith.constant 0 : i32
    return %c0_i32, %c0_i32_0 : i32, i32
  }
  func.func @transform_7(%arg0: i32) -> (i32, i32) {
    %c0_i32 = arith.constant 0 : i32
    %c0_i32_0 = arith.constant 0 : i32
    %c0_i32_1 = arith.constant 0 : i32
    return %c0_i32, %c0_i32_0 : i32, i32
  }
  func.func @transform_8(%arg0: i32) -> (i32, i32) {
    %c0_i32 = arith.constant 0 : i32
    %c0_i32_0 = arith.constant 0 : i32
    %c0_i32_1 = arith.constant 0 : i32
    return %c0_i32, %c0_i32_0 : i32, i32
  }
  func.func @transform_9(%arg0: i32) -> (i32, i32) {
    %c0_i32 = arith.constant 0 : i32
    %c0_i32_0 = arith.constant 0 : i32
    %c0_i32_1 = arith.constant 0 : i32
    return %c0_i32, %c0_i32_0 : i32, i32
  }
  func.func @transform_10(%arg0: i32) -> (i32, i32, i32) {
    %c0_i32 = arith.constant 0 : i32
    %c0_i32_0 = arith.constant 0 : i32
    %c0_i32_1 = arith.constant 0 : i32
    return %arg0, %c0_i32, %c0_i32_0 : i32, i32, i32
  }
  func.func @transform_11(%arg0: i32) -> (i32, i32) {
    %c0_i32 = arith.constant 0 : i32
    %c0_i32_0 = arith.constant 0 : i32
    %c0_i32_1 = arith.constant 0 : i32
    return %c0_i32, %c0_i32_0 : i32, i32
  }
}

</mosaic_0001>

<llo_original>
// kernel: tpu_custom_call.1
$region0: #{tpu_custom_call.1}
  #allocation0 [shape = 'u32[]', space=smem, size = 0x4, offset = 0x4, fixed_abs, tag = 'smem constant byte address 0x4 - core index']
  #allocation1 [shape = 'u32[144,128]{1,0:T(1,128)}', space=vmem, size = 0x12000, scoped, tag = 'internal scratch']
  #allocation2 [shape = 'f32[4,8,96]{2,1,0:T(8,128)}', space=vmem, size = 0x4000, scoped, tag = 'scratch operand']
  #allocation3 [shape = 'f32[4,8,32]{2,1,0:T(8,128)}', space=vmem, size = 0x4000, scoped, tag = 'scratch operand']
  #allocation4 [shape = 'f32[8,32]{1,0:T(8,128)}', space=vmem, size = 0x1000, scoped, tag = 'scratch operand']
  #allocation5 [shape = 'f32[8,32]{1,0:T(8,128)}', space=vmem, size = 0x1000, scoped, tag = 'scratch operand']
  #allocation6 [shape = 'f32[8,1]{1,0:T(8,128)}', space=vmem, size = 0x1000, scoped, tag = 'scratch operand']
  %s0 = inlined_call_operand.vmem [shape: f32[8,8,4], index: 0, kind: input, shape index: {}]
  %s1 = inlined_call_operand.vmem [shape: f32[8,8,1], index: 1, kind: input, shape index: {}]
  %s2 = inlined_call_operand.vmem [shape: f32[4,96], index: 2, kind: input, shape index: {}]
  %s3 = inlined_call_operand.vmem [shape: f32[1,96], index: 3, kind: input, shape index: {}]
  %s4 = inlined_call_operand.vmem [shape: f32[64,194], index: 4, kind: input, shape index: {}]
  %s5 = inlined_call_operand.vmem [shape: f32[1,194], index: 5, kind: input, shape index: {}]
  %s6 = inlined_call_operand.vmem [shape: f32[1,96], index: 6, kind: input, shape index: {}]
  %s7 = inlined_call_operand.vmem [shape: f32[1,96], index: 7, kind: input, shape index: {}]
  %s8 = inlined_call_operand.vmem [shape: f32[32,128], index: 8, kind: input, shape index: {}]
  %s9 = inlined_call_operand.vmem [shape: f32[1,128], index: 9, kind: input, shape index: {}]
  %s10 = inlined_call_operand.hbm [shape: f32[8,8,128], index: 10, kind: output, shape index: {0}]
  %s11 = inlined_call_operand.hbm [shape: f32[1,1], index: 11, kind: output, shape index: {1}]
  %12 = xla_tuple %s10, %s11
  %s13 = sld [smem:[#allocation0]]
  $region89: #{tpu_custom_call.1} parent=0
    _
  %s15 = ssub.s32 1, %s13
  %s16 = scalar_select 0, %s15, %s13
  $region1: #{tpu_custom_call.1} parent=0
    #allocation7 [shape = 'u8[32768]{0}', space=vmem, size = 0x8000, scoped, tag = 'output window, operand 0']
    #allocation8 [shape = 's32[2]{0}', space=sflag, size = 0x8, scoped, tag = 'scoped memory for tpu_custom_call.1']
    #allocation9 [shape = 'u8[512]{0}', space=vmem, size = 0x400, scoped, tag = 'output window, operand 1, single buffered']
    #allocation10 [shape = 's32[1]{0}', space=sflag, size = 0x4, scoped, tag = 'scoped memory for tpu_custom_call.1']
    %17 = vsyncpa [#allocation8], 0
    %s18 = scalar_lea.sflag [#allocation8], 1
    %19 = vsyncpa %s18, 0
    %20 = vsyncpa [#allocation10], 0
    loop: start=0, step=1, limit=4
    $region2: #{tpu_custom_call.1} parent=1 // loop_pre_header
      _
    $region3: #{tpu_custom_call.1} parent=1 // loop_header
      %s22 = sphi 0, %s26
      %p23 = scmp.ge.s32.totalorder %s22, 4
      %s32 = sphi 0, %s34
      %s35 = sphi 0, %s32
      %s36 = sphi 0, %s35
      %s52 = sphi 0, %s36
      %s58 = sphi 0, %s60
      %s61 = sphi 0, %s58
      %s62 = sphi 0, %s61
      %s78 = sphi 0, %s62
      %s82 = sphi 0, %s82
      %s84 = sphi 0, %s82
      %s85 = sphi 0, %s84
      %s99 = sphi 0, %s85
      %s103 = sphi 0, %s103
      %s105 = sphi 0, %s103
      %s106 = sphi 0, %s105
      %s120 = sphi 0, %s106
      %s124 = sphi 0, %s124
      %s126 = sphi 0, %s124
      %s127 = sphi 0, %s126
      %s141 = sphi 0, %s127
      %s145 = sphi 0, %s145
      %s147 = sphi 0, %s145
      %s148 = sphi 0, %s147
      %s162 = sphi 0, %s148
      %s166 = sphi 0, %s166
      %s168 = sphi 0, %s166
      %s169 = sphi 0, %s168
      %s183 = sphi 0, %s169
      %s187 = sphi 0, %s187
      %s189 = sphi 0, %s187
      %s190 = sphi 0, %s189
      %s204 = sphi 0, %s190
      %s208 = sphi 0, %s208
      %s210 = sphi 0, %s208
      %s211 = sphi 0, %s210
      %s225 = sphi 0, %s211
      %s229 = sphi 0, %s229
      %s231 = sphi 0, %s229
      %s232 = sphi 0, %s231
      %s246 = sphi 0, %s232
      %s252 = sphi 0, %s254
      %s255 = sphi 0, %s252
      %s256 = sphi 0, %s255
      %s272 = sphi 0, %s256
      %s276 = sphi 0, %s276
      %s278 = sphi 0, %s276
      %s279 = sphi 0, %s278
      %s293 = sphi 0, %s279
    $region4: #{tpu_custom_call.1} parent=1 // loop_header_branch
      %25 = sbr.rel (%p23) target = $region8
    $region5: #{tpu_custom_call.1} parent=1 // loop_body
      %s27 = ssub.s32 %s22, 1
      %s28 = ssub.s32 %s22, 2
      %s29 = sadd.s32 %s22, 1
      %s30 = ssub.s32 %s22, %s29
      %p31 = scmp.eq.s32.totalorder %s30, 0
      %s33 = sadd.s32 %s32, 1
      %s34 = scalar_select %p31, %s32, %s33
      %p37 = pneg %p31
      %p38 = scmp.eq.s32.totalorder %s22, 1
      %p39 = por %p37, %p38
      %p40 = scmp.ne.s32.totalorder %s32, %s35
      %p41 = scmp.eq.s32.totalorder %s22, 0
      %p42 = por %p40, %p41
      %p43 = scmp.ne.s32.totalorder %s32, %s35
      %p44 = scmp.eq.s32.totalorder %s27, 1
      %p45 = por %p43, %p44
      %p46 = scmp.ne.s32.totalorder %s35, %s36
      %p47 = scmp.eq.s32.totalorder %s27, 0
      %p48 = por %p46, %p47
      %p49 = scmp.ne.s32.totalorder %s35, %s36
      %p50 = scmp.eq.s32.totalorder %s28, 1
      %p51 = por %p49, %p50
      %p53 = scmp.ne.s32.totalorder %s36, %s52
      %p54 = scmp.eq.s32.totalorder %s28, 0
      %p55 = por %p53, %p54
      %s56 = ssub.s32 %s22, %s29
      %p57 = scmp.eq.s32.totalorder %s56, 0
      %s59 = sadd.s32 %s58, 1
      %s60 = scalar_select %p57, %s58, %s59
      %p63 = pneg %p57
      %p64 = scmp.eq.s32.totalorder %s22, 1
      %p65 = por %p63, %p64
      %p66 = scmp.ne.s32.totalorder %s58, %s61
      %p67 = scmp.eq.s32.totalorder %s22, 0
      %p68 = por %p66, %p67
      %p69 = scmp.ne.s32.totalorder %s58, %s61
      %p70 = scmp.eq.s32.totalorder %s27, 1
      %p71 = por %p69, %p70
      %p72 = scmp.ne.s32.totalorder %s61, %s62
      %p73 = scmp.eq.s32.totalorder %s27, 0
      %p74 = por %p72, %p73
      %p75 = scmp.ne.s32.totalorder %s61, %s62
      %p76 = scmp.eq.s32.totalorder %s28, 1
      %p77 = por %p75, %p76
      %p79 = scmp.ne.s32.totalorder %s62, %s78
      %p80 = scmp.eq.s32.totalorder %s28, 0
      %p81 = por %p79, %p80
      %s83 = sadd.s32 %s82, 1
      %p86 = scmp.eq.s32.totalorder %s22, 1
      %p87 = scmp.ne.s32.totalorder %s82, %s84
      %p88 = scmp.eq.s32.totalorder %s22, 0
      %p89 = por %p87, %p88
      %p90 = scmp.ne.s32.totalorder %s82, %s84
      %p91 = scmp.eq.s32.totalorder %s27, 1
      %p92 = por %p90, %p91
      %p93 = scmp.ne.s32.totalorder %s84, %s85
      %p94 = scmp.eq.s32.totalorder %s27, 0
      %p95 = por %p93, %p94
      %p96 = scmp.ne.s32.totalorder %s84, %s85
      %p97 = scmp.eq.s32.totalorder %s28, 1
      %p98 = por %p96, %p97
      %p100 = scmp.ne.s32.totalorder %s85, %s99
      %p101 = scmp.eq.s32.totalorder %s28, 0
      %p102 = por %p100, %p101
      %s104 = sadd.s32 %s103, 1
      %p107 = scmp.eq.s32.totalorder %s22, 1
      %p108 = scmp.ne.s32.totalorder %s103, %s105
      %p109 = scmp.eq.s32.totalorder %s22, 0
      %p110 = por %p108, %p109
      %p111 = scmp.ne.s32.totalorder %s103, %s105
      %p112 = scmp.eq.s32.totalorder %s27, 1
      %p113 = por %p111, %p112
      %p114 = scmp.ne.s32.totalorder %s105, %s106
      %p115 = scmp.eq.s32.totalorder %s27, 0
      %p116 = por %p114, %p115
      %p117 = scmp.ne.s32.totalorder %s105, %s106
      %p118 = scmp.eq.s32.totalorder %s28, 1
      %p119 = por %p117, %p118
      %p121 = scmp.ne.s32.totalorder %s106, %s120
      %p122 = scmp.eq.s32.totalorder %s28, 0
      %p123 = por %p121, %p122
      %s125 = sadd.s32 %s124, 1
      %p128 = scmp.eq.s32.totalorder %s22, 1
      %p129 = scmp.ne.s32.totalorder %s124, %s126
      %p130 = scmp.eq.s32.totalorder %s22, 0
      %p131 = por %p129, %p130
      %p132 = scmp.ne.s32.totalorder %s124, %s126
      %p133 = scmp.eq.s32.totalorder %s27, 1
      %p134 = por %p132, %p133
      %p135 = scmp.ne.s32.totalorder %s126, %s127
      %p136 = scmp.eq.s32.totalorder %s27, 0
      %p137 = por %p135, %p136
      %p138 = scmp.ne.s32.totalorder %s126, %s127
      %p139 = scmp.eq.s32.totalorder %s28, 1
      %p140 = por %p138, %p139
      %p142 = scmp.ne.s32.totalorder %s127, %s141
      %p143 = scmp.eq.s32.totalorder %s28, 0
      %p144 = por %p142, %p143
      %s146 = sadd.s32 %s145, 1
      %p149 = scmp.eq.s32.totalorder %s22, 1
      %p150 = scmp.ne.s32.totalorder %s145, %s147
      %p151 = scmp.eq.s32.totalorder %s22, 0
      %p152 = por %p150, %p151
      %p153 = scmp.ne.s32.totalorder %s145, %s147
      %p154 = scmp.eq.s32.totalorder %s27, 1
      %p155 = por %p153, %p154
      %p156 = scmp.ne.s32.totalorder %s147, %s148
      %p157 = scmp.eq.s32.totalorder %s27, 0
      %p158 = por %p156, %p157
      %p159 = scmp.ne.s32.totalorder %s147, %s148
      %p160 = scmp.eq.s32.totalorder %s28, 1
      %p161 = por %p159, %p160
      %p163 = scmp.ne.s32.totalorder %s148, %s162
      %p164 = scmp.eq.s32.totalorder %s28, 0
      %p165 = por %p163, %p164
      %s167 = sadd.s32 %s166, 1
      %p170 = scmp.eq.s32.totalorder %s22, 1
      %p171 = scmp.ne.s32.totalorder %s166, %s168
      %p172 = scmp.eq.s32.totalorder %s22, 0
      %p173 = por %p171, %p172
      %p174 = scmp.ne.s32.totalorder %s166, %s168
      %p175 = scmp.eq.s32.totalorder %s27, 1
      %p176 = por %p174, %p175
      %p177 = scmp.ne.s32.totalorder %s168, %s169
      %p178 = scmp.eq.s32.totalorder %s27, 0
      %p179 = por %p177, %p178
      %p180 = scmp.ne.s32.totalorder %s168, %s169
      %p181 = scmp.eq.s32.totalorder %s28, 1
      %p182 = por %p180, %p181
      %p184 = scmp.ne.s32.totalorder %s169, %s183
      %p185 = scmp.eq.s32.totalorder %s28, 0
      %p186 = por %p184, %p185
      %s188 = sadd.s32 %s187, 1
      %p191 = scmp.eq.s32.totalorder %s22, 1
      %p192 = scmp.ne.s32.totalorder %s187, %s189
      %p193 = scmp.eq.s32.totalorder %s22, 0
      %p194 = por %p192, %p193
      %p195 = scmp.ne.s32.totalorder %s187, %s189
      %p196 = scmp.eq.s32.totalorder %s27, 1
      %p197 = por %p195, %p196
      %p198 = scmp.ne.s32.totalorder %s189, %s190
      %p199 = scmp.eq.s32.totalorder %s27, 0
      %p200 = por %p198, %p199
      %p201 = scmp.ne.s32.totalorder %s189, %s190
      %p202 = scmp.eq.s32.totalorder %s28, 1
      %p203 = por %p201, %p202
      %p205 = scmp.ne.s32.totalorder %s190, %s204
      %p206 = scmp.eq.s32.totalorder %s28, 0
      %p207 = por %p205, %p206
      %s209 = sadd.s32 %s208, 1
      %p212 = scmp.eq.s32.totalorder %s22, 1
      %p213 = scmp.ne.s32.totalorder %s208, %s210
      %p214 = scmp.eq.s32.totalorder %s22, 0
      %p215 = por %p213, %p214
      %p216 = scmp.ne.s32.totalorder %s208, %s210
      %p217 = scmp.eq.s32.totalorder %s27, 1
      %p218 = por %p216, %p217
      %p219 = scmp.ne.s32.totalorder %s210, %s211
      %p220 = scmp.eq.s32.totalorder %s27, 0
      %p221 = por %p219, %p220
      %p222 = scmp.ne.s32.totalorder %s210, %s211
      %p223 = scmp.eq.s32.totalorder %s28, 1
      %p224 = por %p222, %p223
      %p226 = scmp.ne.s32.totalorder %s211, %s225
      %p227 = scmp.eq.s32.totalorder %s28, 0
      %p228 = por %p226, %p227
      %s230 = sadd.s32 %s229, 1
      %p233 = scmp.eq.s32.totalorder %s22, 1
      %p234 = scmp.ne.s32.totalorder %s229, %s231
      %p235 = scmp.eq.s32.totalorder %s22, 0
      %p236 = por %p234, %p235
      %p237 = scmp.ne.s32.totalorder %s229, %s231
      %p238 = scmp.eq.s32.totalorder %s27, 1
      %p239 = por %p237, %p238
      %p240 = scmp.ne.s32.totalorder %s231, %s232
      %p241 = scmp.eq.s32.totalorder %s27, 0
      %p242 = por %p240, %p241
      %p243 = scmp.ne.s32.totalorder %s231, %s232
      %p244 = scmp.eq.s32.totalorder %s28, 1
      %p245 = por %p243, %p244
      %p247 = scmp.ne.s32.totalorder %s232, %s246
      %p248 = scmp.eq.s32.totalorder %s28, 0
      %p249 = por %p247, %p248
      %s250 = ssub.s32 %s22, %s29
      %p251 = scmp.eq.s32.totalorder %s250, 0
      %s253 = sadd.s32 %s252, 1
      %s254 = scalar_select %p251, %s252, %s253
      %p257 = pneg %p251
      %p258 = scmp.eq.s32.totalorder %s22, 1
      %p259 = por %p257, %p258
      %p260 = scmp.ne.s32.totalorder %s252, %s255
      %p261 = scmp.eq.s32.totalorder %s22, 0
      %p262 = por %p260, %p261
      %p263 = scmp.ne.s32.totalorder %s252, %s255
      %p264 = scmp.eq.s32.totalorder %s27, 1
      %p265 = por %p263, %p264
      %p266 = scmp.ne.s32.totalorder %s255, %s256
      %p267 = scmp.eq.s32.totalorder %s27, 0
      %p268 = por %p266, %p267
      %p269 = scmp.ne.s32.totalorder %s255, %s256
      %p270 = scmp.eq.s32.totalorder %s28, 1
      %p271 = por %p269, %p270
      %p273 = scmp.ne.s32.totalorder %s256, %s272
      %p274 = scmp.eq.s32.totalorder %s28, 0
      %p275 = por %p273, %p274
      %s277 = sadd.s32 %s276, 1
      %p280 = scmp.eq.s32.totalorder %s22, 1
      %p281 = scmp.ne.s32.totalorder %s276, %s278
      %p282 = scmp.eq.s32.totalorder %s22, 0
      %p283 = por %p281, %p282
      %p284 = scmp.ne.s32.totalorder %s276, %s278
      %p285 = scmp.eq.s32.totalorder %s27, 1
      %p286 = por %p284, %p285
      %p287 = scmp.ne.s32.totalorder %s278, %s279
      %p288 = scmp.eq.s32.totalorder %s27, 0
      %p289 = por %p287, %p288
      %p290 = scmp.ne.s32.totalorder %s278, %s279
      %p291 = scmp.eq.s32.totalorder %s28, 1
      %p292 = por %p290, %p291
      %p294 = scmp.ne.s32.totalorder %s279, %s293
      %p295 = scmp.eq.s32.totalorder %s28, 0
      %p296 = por %p294, %p295
      %p297 = scmp.le.s32.totalorder 1, %s22
      %p298 = scmp.lt.s32.totalorder %s22, 3
      %p299 = pnand %p297, %p298
      %p300 = pneg %p299
      // Predicated region
      $region9: #{tpu_custom_call.1} parent=5 // pred_check
        _
      $region10: #{tpu_custom_call.1} parent=5 // pred_check_branch
        %302 = sbr.rel (%p299) target = $region12
      $region11: #{tpu_custom_call.1} parent=5 // pred_region
        %s303 = ssub.s32 %s22, 1
        // Predicated region
        $region13: #{tpu_custom_call.1} parent=11 // pred_check
          %p304 = pneg %p95
        $region14: #{tpu_custom_call.1} parent=11 // pred_check_branch
          %306 = sbr.rel (%p304) target = $region16
        $region15: #{tpu_custom_call.1} parent=11 // pred_region
          _
        $region16: #{tpu_custom_call.1} parent=11 // pred_fallthru
          _
        // Predicated region
        $region17: #{tpu_custom_call.1} parent=11 // pred_check
          %p307 = pneg %p116
        $region18: #{tpu_custom_call.1} parent=11 // pred_check_branch
          %309 = sbr.rel (%p307) target = $region20
        $region19: #{tpu_custom_call.1} parent=11 // pred_region
          _
        $region20: #{tpu_custom_call.1} parent=11 // pred_fallthru
          _
        // Predicated region
        $region21: #{tpu_custom_call.1} parent=11 // pred_check
          %p310 = pneg %p137
        $region22: #{tpu_custom_call.1} parent=11 // pred_check_branch
          %312 = sbr.rel (%p310) target = $region24
        $region23: #{tpu_custom_call.1} parent=11 // pred_region
          _
        $region24: #{tpu_custom_call.1} parent=11 // pred_fallthru
          _
        // Predicated region
        $region25: #{tpu_custom_call.1} parent=11 // pred_check
          %p313 = pneg %p158
        $region26: #{tpu_custom_call.1} parent=11 // pred_check_branch
          %315 = sbr.rel (%p313) target = $region28
        $region27: #{tpu_custom_call.1} parent=11 // pred_region
          _
        $region28: #{tpu_custom_call.1} parent=11 // pred_fallthru
          _
        // Predicated region
        $region29: #{tpu_custom_call.1} parent=11 // pred_check
          %p316 = pneg %p179
        $region30: #{tpu_custom_call.1} parent=11 // pred_check_branch
          %318 = sbr.rel (%p316) target = $region32
        $region31: #{tpu_custom_call.1} parent=11 // pred_region
          _
        $region32: #{tpu_custom_call.1} parent=11 // pred_fallthru
          _
        // Predicated region
        $region33: #{tpu_custom_call.1} parent=11 // pred_check
          %p319 = pneg %p200
        $region34: #{tpu_custom_call.1} parent=11 // pred_check_branch
          %321 = sbr.rel (%p319) target = $region36
        $region35: #{tpu_custom_call.1} parent=11 // pred_region
          _
        $region36: #{tpu_custom_call.1} parent=11 // pred_fallthru
          _
        // Predicated region
        $region37: #{tpu_custom_call.1} parent=11 // pred_check
          %p322 = pneg %p221
        $region38: #{tpu_custom_call.1} parent=11 // pred_check_branch
          %324 = sbr.rel (%p322) target = $region40
        $region39: #{tpu_custom_call.1} parent=11 // pred_region
          _
        $region40: #{tpu_custom_call.1} parent=11 // pred_fallthru
          _
        // Predicated region
        $region41: #{tpu_custom_call.1} parent=11 // pred_check
          %p325 = pneg %p242
        $region42: #{tpu_custom_call.1} parent=11 // pred_check_branch
          %327 = sbr.rel (%p325) target = $region44
        $region43: #{tpu_custom_call.1} parent=11 // pred_region
          _
        $region44: #{tpu_custom_call.1} parent=11 // pred_fallthru
          _
      $region12: #{tpu_custom_call.1} parent=5 // pred_fallthru
        _
      %p328 = scmp.lt.s32.totalorder %s22, 2
      // Predicated region
      $region45: #{tpu_custom_call.1} parent=5 // pred_check
        %p329 = pneg %p328
      $region46: #{tpu_custom_call.1} parent=5 // pred_check_branch
        %331 = sbr.rel (%p329) target = $region48
      $region47: #{tpu_custom_call.1} parent=5 // pred_region
        // Predicated region
        $region49: #{tpu_custom_call.1} parent=47 // pred_check
          %p332 = pneg %p42
        $region50: #{tpu_custom_call.1} parent=47 // pred_check_branch
          %334 = sbr.rel (%p332) target = $region52
        $region51: #{tpu_custom_call.1} parent=47 // pred_region
          %s335 = smul.u32 4, %s22
          %p336 = scmp.lt.s32.totalorder %s335, 7
          %s337 = scalar_select %p336, %s335, 7
          %s338 = smul.addr %s337, 8
          %s339 = scalar_lea.vmem %s0, %s338
          %s340 = smul.u32 4, %s22
        $region52: #{tpu_custom_call.1} parent=47 // pred_fallthru
          _
        // Predicated region
        $region53: #{tpu_custom_call.1} parent=47 // pred_check
          %p341 = pneg %p68
        $region54: #{tpu_custom_call.1} parent=47 // pred_check_branch
          %343 = sbr.rel (%p341) target = $region56
        $region55: #{tpu_custom_call.1} parent=47 // pred_region
          %s344 = smul.u32 4, %s22
          %p345 = scmp.lt.s32.totalorder %s344, 7
          %s346 = scalar_select %p345, %s344, 7
          %s347 = smul.addr %s346, 8
          %s348 = scalar_lea.vmem %s1, %s347
          %s349 = smul.u32 4, %s22
        $region56: #{tpu_custom_call.1} parent=47 // pred_fallthru
          _
      $region48: #{tpu_custom_call.1} parent=5 // pred_fallthru
        _
      %p350 = scmp.le.s32.totalorder 1, %s22
      %p351 = scmp.lt.s32.totalorder %s22, 3
      %p352 = pnand %p350, %p351
      %p353 = pneg %p352
      // Predicated region
      $region57: #{tpu_custom_call.1} parent=5 // pred_check
        _
      $region58: #{tpu_custom_call.1} parent=5 // pred_check_branch
        %355 = sbr.rel (%p352) target = $region60
      $region59: #{tpu_custom_call.1} parent=5 // pred_region
        %s356 = ssub.s32 %s22, 1
        %s357 = smul.u32 4, %s27
        %p358 = scmp.lt.s32.totalorder %s357, 7
        %s359 = scalar_select %p358, %s357, 7
        %s360 = smul.addr %s359, 8
        %s361 = scalar_lea.vmem %s0, %s360
        %p362 = pneg %p48
        %p363 = pneg %p45
        %s364 = smul.u32 4, %s27
        %p365 = scmp.lt.s32.totalorder %s364, 7
        %s366 = scalar_select %p365, %s364, 7
        %s367 = smul.addr %s366, 8
        %s368 = scalar_lea.vmem %s1, %s367
        %p369 = pneg %p74
        %p370 = pneg %p71
        %p371 = pneg %p95
        %p372 = pneg %p92
        %p373 = pneg %p116
        %p374 = pneg %p113
        %p375 = pneg %p137
        %p376 = pneg %p134
        %p377 = pneg %p158
        %p378 = pneg %p155
        %p379 = pneg %p179
        %p380 = pneg %p176
        %p381 = pneg %p200
        %p382 = pneg %p197
        %p383 = pneg %p221
        %p384 = pneg %p218
        %p385 = pneg %p242
        %p386 = pneg %p239
        %p387 = pneg %p268
        %p388 = pneg %p265
        %s389 = sand.u32 %s255, 1
        %s390 = scalar_lea.sflag [#allocation8], %s389
        %s391 = sand.u32 %s255, 1
        %s392 = smul.addr %s391, 32
        %s393 = scalar_lea.vmem [#allocation7], %s392
        %p394 = pneg %p289
        %p395 = pneg %p286
        %s396 = smul.u32 4, %s27
        %p397 = scmp.lt.s32.totalorder %s396, 7
        %s398 = scalar_select %p397, %s396, 7
        %s399 = smul.addr %s398, 8
        %s400 = scalar_lea.vmem %s0, %s399
        %s401 = smul.u32 4, %s27
        %s402 = smul.u32 4, %s27
        %p403 = scmp.lt.s32.totalorder %s402, 7
        %s404 = scalar_select %p403, %s402, 7
        %s405 = smul.addr %s404, 8
        %s406 = scalar_lea.vmem %s1, %s405
        %s407 = smul.u32 4, %s27
        %s408 = smul.u32 4, %s27
        %p409 = scmp.eq.s32.totalorder %s27, 0
        // Predicated region
        $region61: #{tpu_custom_call.1} parent=59 // pred_check
          %p410 = pneg %p409
        $region62: #{tpu_custom_call.1} parent=59 // pred_check_branch
          %412 = sbr.rel (%p410) target = $region64
        $region63: #{tpu_custom_call.1} parent=59 // pred_region
          %vm413 = vcmask 261120
          %414 = vst.msk [vmem:[#allocation4] sm:$0xff] %vm413, 0.0
          %415 = vst.msk [vmem:[#allocation5] sm:$0xff] %vm413, 0.0
          %vm416 = vcmask 7168
          %417 = vst.msk [vmem:[#allocation6] sm:$0xff] %vm416, 0.0
          %vm418 = vcmask 0
          %419 = vst.msk [vmem:[#allocation9] sm:$0x1] %vm418, 0.0
        $region64: #{tpu_custom_call.1} parent=59 // pred_fallthru
          _
        %v420 = vld [vmem:[%s400] sm:$0xff]
        %v421 = vld [vmem:[%s400 + $0x8] sm:$0xff]
        %v422 = vld [vmem:[%s400 + $0x10] sm:$0xff]
        %v423 = vld [vmem:[%s400 + $0x18] sm:$0xff]
        %v424 = vld [vmem:[%s2] sm:$0xf]
        %v425 = vld [vmem:[%s3] sm:$0x1]
        %v427 = vlaneseq
        %v428 = vshrl.u32 %v427, 7
        %v429 = vsub.s32 0, %v428
        %v430 = vrot.slane %v425, %v429
        %vm432 = vcmask 31744
        %v434 = vsel %vm432, %v420, 0
        %v437 = vsel %vm432, %v421, 0
        %v440 = vsel %vm432, %v422, 0
        %v443 = vsel %vm432, %v423, 0
        %vm445 = vcmask 1043456
        %v447 = vsel %vm445, %v424, 0
        %449 = vmatprep.subr.mxu0 0.0
        %450 = vmatpush1.msra.mxu0 %v447
        %451 = vmatprep.subr.mxu0 0.0
        %452 = vmatpush1.msra.mxu0 0.0
        %453 = vmatprep.subr.mxu0 0.0
        %454 = vmatpush1.msra.mxu0 0.0
        %455 = vmatprep.subr.mxu0 0.0
        %456 = vmatpush1.msra.mxu0 0.0
        %457 = vmatprep.subr.mxu0 0.0
        %458 = vmatpush1.msra.mxu0 0.0
        %459 = vmatprep.subr.mxu0 0.0
        %460 = vmatpush1.msra.mxu0 0.0
        %461 = vmatprep.subr.mxu0 0.0
        %462 = vmatpush1.msra.mxu0 0.0
        %463 = vmatprep.subr.mxu0 0.0
        %464 = vmatpush1.msra.mxu0 0.0
        %465 = vmatprep.subr.mxu0 0.0
        %466 = vmatpush1.msra.mxu0 0.0
        %467 = vmatprep.subr.mxu0 0.0
        %468 = vmatpush1.msra.mxu0 0.0
        %469 = vmatprep.subr.mxu0 0.0
        %470 = vmatpush1.msra.mxu0 0.0
        %471 = vmatprep.subr.mxu0 0.0
        %472 = vmatpush1.msra.mxu0 0.0
        %473 = vmatprep.subr.mxu0 0.0
        %474 = vmatpush1.msra.mxu0 0.0
        %475 = vmatprep.subr.mxu0 0.0
        %476 = vmatpush1.msra.mxu0 0.0
        %477 = vmatprep.subr.mxu0 0.0
        %478 = vmatpush1.msra.mxu0 0.0
        %479 = vmatprep.subr.mxu0 0.0
        %480 = vmatpush1.msra.mxu0 0.0
        %481 = vmatprep.subr.mxu0 0.0
        %482 = vmatpush1.msra.mxu0 0.0
        %483 = vmatprep.subr.mxu0 0.0
        %484 = vmatpush1.msra.mxu0 0.0
        %485 = vmatprep.subr.mxu0 0.0
        %486 = vmatpush1.msra.mxu0 0.0
        %487 = vmatprep.subr.mxu0 0.0
        %488 = vmatpush1.msra.mxu0 0.0
        %489 = vmatprep.subr.mxu0 0.0
        %490 = vmatpush1.msra.mxu0 0.0
        %491 = vmatprep.subr.mxu0 0.0
        %492 = vmatpush1.msra.mxu0 0.0
        %493 = vmatprep.subr.mxu0 0.0
        %494 = vmatpush1.msra.mxu0 0.0
        %495 = vmatprep.subr.mxu0 0.0
        %496 = vmatpush1.msra.mxu0 0.0
        %497 = vmatprep.subr.mxu0 0.0
        %498 = vmatpush1.msra.mxu0 0.0
        %499 = vmatprep.subr.mxu0 0.0
        %500 = vmatpush1.msra.mxu0 0.0
        %501 = vmatprep.subr.mxu0 0.0
        %502 = vmatpush1.msra.mxu0 0.0
        %503 = vmatprep.subr.mxu0 0.0
        %504 = vmatpush1.msra.mxu0 0.0
        %505 = vmatprep.subr.mxu0 0.0
        %506 = vmatpush1.msra.mxu0 0.0
        %507 = vmatprep.subr.mxu0 0.0
        %508 = vmatpush1.msra.mxu0 0.0
        %509 = vmatprep.subr.mxu0 0.0
        %510 = vmatpush1.msra.mxu0 0.0
        %511 = vmatprep.subr.mxu0 0.0
        %512 = vmatpush1.msra.mxu0 0.0
        %513 = vmatprep.mubr.f32.mxu0 0.0
        %514 = vmatmul.mubr.f32.gmra.mrb[0].mxu0 %v434
        %v515 = vpop.f32.mrb[0].mxu0
        %v516 = vadd.f32 %v430, %v515
        %v517 = vpop.f32.mrb[0].mxu0
        %518 = vmatprep.mubr.f32.mxu0 0.0
        %519 = vmatmul.mubr.f32.gmra.mrb[0].mxu0 %v437
        %v520 = vpop.f32.mrb[0].mxu0
        %v521 = vadd.f32 %v430, %v520
        %v522 = vpop.f32.mrb[0].mxu0
        %523 = vmatprep.mubr.f32.mxu0 0.0
        %524 = vmatmul.mubr.f32.gmra.mrb[0].mxu0 %v440
        %v525 = vpop.f32.mrb[0].mxu0
        %v526 = vadd.f32 %v430, %v525
        %v527 = vpop.f32.mrb[0].mxu0
        %528 = vmatprep.mubr.f32.mxu0 0.0
        %529 = vmatmul.mubr.f32.gmra.mrb[0].mxu0 %v443
        %v530 = vpop.f32.mrb[0].mxu0
        %v531 = vadd.f32 %v430, %v530
        %v532 = vpop.f32.mrb[0].mxu0
        %533 = vdwg.mxu0
        %vm534 = vcmask 785408
        %535 = vst.msk [vmem:[#allocation2] sm:$0xff] %vm534, %v516
        %536 = vst.msk [vmem:[#allocation2 + $0x8] sm:$0xff] %vm534, %v521
        %537 = vst.msk [vmem:[#allocation2 + $0x10] sm:$0xff] %vm534, %v526
        %538 = vst.msk [vmem:[#allocation2 + $0x18] sm:$0xff] %vm534, %v531
        %v539 = vld [vmem:[%s4] sm:$0xff]
        %v540 = vld [vmem:[%s4 + $0x8] sm:$0xff]
        %v541 = vld [vmem:[%s4 + $0x10] sm:$0xff]
        %v542 = vld [vmem:[%s4 + $0x18] sm:$0xff]
        %v543 = vld [vmem:[%s4 + $0x20] sm:$0xff]
        %v544 = vld [vmem:[%s4 + $0x28] sm:$0xff]
        %v545 = vld [vmem:[%s4 + $0x30] sm:$0xff]
        %v546 = vld [vmem:[%s4 + $0x38] sm:$0xff]
        %v547 = vld [vmem:[%s4 + $0x40] sm:$0xff]
        %v548 = vld [vmem:[%s4 + $0x48] sm:$0xff]
        %v549 = vld [vmem:[%s4 + $0x50] sm:$0xff]
        %v550 = vld [vmem:[%s4 + $0x58] sm:$0xff]
        %v551 = vld [vmem:[%s4 + $0x60] sm:$0xff]
        %v552 = vld [vmem:[%s4 + $0x68] sm:$0xff]
        %v553 = vld [vmem:[%s4 + $0x70] sm:$0xff]
        %v554 = vld [vmem:[%s4 + $0x78] sm:$0xff]
        %v555 = vld [vmem:[%s5] sm:$0x3]
        %v557 = vlaneseq
        %v558 = vshrl.u32 %v557, 7
        %v559 = vsub.s32 0, %v558
        %v560 = vrot.slane %v555, %v559
        %v561 = vlaneseq
        %v562 = vshrl.u32 %v561, 7
        %v563 = vsub.s32 1, %v562
        %v564 = vrot.slane %v555, %v563
        %v567 = vld [vmem:[%s6] sm:$0x1]
        %v569 = vlaneseq
        %v570 = vshrl.u32 %v569, 7
        %v571 = vsub.s32 0, %v570
        %v572 = vrot.slane %v567, %v571
        %v574 = vld [vmem:[%s7] sm:$0x1]
        %v576 = vlaneseq
        %v577 = vshrl.u32 %v576, 7
        %v578 = vsub.s32 0, %v577
        %v579 = vrot.slane %v574, %v578
        %v581 = vld [vmem:[#allocation4] sm:$0xff]
        %v582 = vld [vmem:[#allocation5] sm:$0xff]
        %584 = vrot.lane.b32.xlu0 %v582, 32
        %v585 = vpop.permute.xlu0 %584
        %vm587 = vcmask 261120
        %v588 = vsel %vm587, %v581, %v585
        %vm589 = vcmask 523264
        %v591 = vsel %vm589, %v588, 0
        %593 = vmatprep.subr.mxu0 %v540
        %594 = vmatpush1.msra.mxu0 %v539
        %595 = vmatprep.subr.mxu0 %v542
        %596 = vmatpush1.msra.mxu0 %v541
        %597 = vmatprep.subr.mxu0 %v544
        %598 = vmatpush1.msra.mxu0 %v543
        %599 = vmatprep.subr.mxu0 %v546
        %600 = vmatpush1.msra.mxu0 %v545
        %601 = vmatprep.subr.mxu0 %v548
        %602 = vmatpush1.msra.mxu0 %v547
        %603 = vmatprep.subr.mxu0 %v550
        %604 = vmatpush1.msra.mxu0 %v549
        %605 = vmatprep.subr.mxu0 %v552
        %606 = vmatpush1.msra.mxu0 %v551
        %607 = vmatprep.subr.mxu0 %v554
        %608 = vmatpush1.msra.mxu0 %v553
        %609 = vmatprep.subr.mxu0 0.0
        %610 = vmatpush1.msra.mxu0 0.0
        %611 = vmatprep.subr.mxu0 0.0
        %612 = vmatpush1.msra.mxu0 0.0
        %613 = vmatprep.subr.mxu0 0.0
        %614 = vmatpush1.msra.mxu0 0.0
        %615 = vmatprep.subr.mxu0 0.0
        %616 = vmatpush1.msra.mxu0 0.0
        %617 = vmatprep.subr.mxu0 0.0
        %618 = vmatpush1.msra.mxu0 0.0
        %619 = vmatprep.subr.mxu0 0.0
        %620 = vmatpush1.msra.mxu0 0.0
        %621 = vmatprep.subr.mxu0 0.0
        %622 = vmatpush1.msra.mxu0 0.0
        %623 = vmatprep.subr.mxu0 0.0
        %624 = vmatpush1.msra.mxu0 0.0
        %625 = vmatprep.subr.mxu0 0.0
        %626 = vmatpush1.msra.mxu0 0.0
        %627 = vmatprep.subr.mxu0 0.0
        %628 = vmatpush1.msra.mxu0 0.0
        %629 = vmatprep.subr.mxu0 0.0
        %630 = vmatpush1.msra.mxu0 0.0
        %631 = vmatprep.subr.mxu0 0.0
        %632 = vmatpush1.msra.mxu0 0.0
        %633 = vmatprep.subr.mxu0 0.0
        %634 = vmatpush1.msra.mxu0 0.0
        %635 = vmatprep.subr.mxu0 0.0
        %636 = vmatpush1.msra.mxu0 0.0
        %637 = vmatprep.subr.mxu0 0.0
        %638 = vmatpush1.msra.mxu0 0.0
        %639 = vmatprep.subr.mxu0 0.0
        %640 = vmatpush1.msra.mxu0 0.0
        %641 = vmatprep.subr.mxu0 0.0
        %642 = vmatpush1.msra.mxu0 0.0
        %643 = vmatprep.subr.mxu0 0.0
        %644 = vmatpush1.msra.mxu0 0.0
        %645 = vmatprep.subr.mxu0 0.0
        %646 = vmatpush1.msra.mxu0 0.0
        %647 = vmatprep.subr.mxu0 0.0
        %648 = vmatpush1.msra.mxu0 0.0
        %649 = vmatprep.subr.mxu0 0.0
        %650 = vmatpush1.msra.mxu0 0.0
        %651 = vmatprep.subr.mxu0 0.0
        %652 = vmatpush1.msra.mxu0 0.0
        %653 = vmatprep.subr.mxu0 0.0
        %654 = vmatpush1.msra.mxu0 0.0
        %655 = vmatprep.subr.mxu0 0.0
        %656 = vmatpush1.msra.mxu0 0.0
        %657 = vmatprep.mubr.f32.mxu0 0.0
        %658 = vmatmul.mubr.f32.gmra.mrb[0].mxu0 %v591
        %v659 = vpop.f32.mrb[0].mxu0
        %v660 = vadd.f32 %v560, %v659
        %v661 = vpop.f32.mrb[0].mxu0
        %662 = vdwg.mxu0
        %v663 = vld [vmem:[#allocation2] sm:$0xff]
        %v664 = vadd.f32 %v663, %v660
        %v665 = vxor.u32 %v664, 2147483648
        %v666 = vmul.f32 %v665, 1.442695
        %v667 = vpow.pop %v666
        %v668 = vadd.f32 %v667, 1.0
        %v669 = vrcp.pop %v668
        %v670 = vmul.f32 1.0, %v669
        %672 = vrot.lane.b32.xlu0 %v660, 64
        %v673 = vpop.permute.xlu0 %672
        %v675 = vmul.f32 %v670, %v673
        %677 = vrot.lane.b32.xlu0 %v675, 64
        %v678 = vpop.permute.xlu0 %677
        %v680 = vadd.f32 %v663, %v678
        %v681 = vtanh.pop %v680
        %v682 = vsub.f32 1.0, %v670
        %684 = vrot.lane.b32.xlu0 %v681, 96
        %v685 = vpop.permute.xlu0 %684
        %v687 = vmul.f32 %v682, %v685
        %689 = vrot.lane.b32.xlu0 %v581, 32
        %v690 = vpop.permute.xlu0 %689
        %v692 = vmul.f32 %v670, %v690
        %v693 = vadd.f32 %v687, %v692
        %v694 = vld [vmem:[#allocation6] sm:$0xff]
        %696 = vrot.lane.b32.xlu0 %v693, 96
        %v697 = vpop.permute.xlu0 %696
        %v699 = vsel %vm587, %v697, %v585
        %v701 = vsel %vm589, %v699, 0
        %703 = vmatprep.subr.mxu0 %v540
        %704 = vmatpush1.msra.mxu0 %v539
        %705 = vmatprep.subr.mxu0 %v542
        %706 = vmatpush1.msra.mxu0 %v541
        %707 = vmatprep.subr.mxu0 %v544
        %708 = vmatpush1.msra.mxu0 %v543
        %709 = vmatprep.subr.mxu0 %v546
        %710 = vmatpush1.msra.mxu0 %v545
        %711 = vmatprep.subr.mxu0 %v548
        %712 = vmatpush1.msra.mxu0 %v547
        %713 = vmatprep.subr.mxu0 %v550
        %714 = vmatpush1.msra.mxu0 %v549
        %715 = vmatprep.subr.mxu0 %v552
        %716 = vmatpush1.msra.mxu0 %v551
        %717 = vmatprep.subr.mxu0 %v554
        %718 = vmatpush1.msra.mxu0 %v553
        %719 = vmatprep.subr.mxu0 0.0
        %720 = vmatpush1.msra.mxu0 0.0
        %721 = vmatprep.subr.mxu0 0.0
        %722 = vmatpush1.msra.mxu0 0.0
        %723 = vmatprep.subr.mxu0 0.0
        %724 = vmatpush1.msra.mxu0 0.0
        %725 = vmatprep.subr.mxu0 0.0
        %726 = vmatpush1.msra.mxu0 0.0
        %727 = vmatprep.subr.mxu0 0.0
        %728 = vmatpush1.msra.mxu0 0.0
        %729 = vmatprep.subr.mxu0 0.0
        %730 = vmatpush1.msra.mxu0 0.0
        %731 = vmatprep.subr.mxu0 0.0
        %732 = vmatpush1.msra.mxu0 0.0
        %733 = vmatprep.subr.mxu0 0.0
        %734 = vmatpush1.msra.mxu0 0.0
        %735 = vmatprep.subr.mxu0 0.0
        %736 = vmatpush1.msra.mxu0 0.0
        %737 = vmatprep.subr.mxu0 0.0
        %738 = vmatpush1.msra.mxu0 0.0
        %739 = vmatprep.subr.mxu0 0.0
        %740 = vmatpush1.msra.mxu0 0.0
        %741 = vmatprep.subr.mxu0 0.0
        %742 = vmatpush1.msra.mxu0 0.0
        %743 = vmatprep.subr.mxu0 0.0
        %744 = vmatpush1.msra.mxu0 0.0
        %745 = vmatprep.subr.mxu0 0.0
        %746 = vmatpush1.msra.mxu0 0.0
        %747 = vmatprep.subr.mxu0 0.0
        %748 = vmatpush1.msra.mxu0 0.0
        %749 = vmatprep.subr.mxu0 0.0
        %750 = vmatpush1.msra.mxu0 0.0
        %751 = vmatprep.subr.mxu0 0.0
        %752 = vmatpush1.msra.mxu0 0.0
        %753 = vmatprep.subr.mxu0 0.0
        %754 = vmatpush1.msra.mxu0 0.0
        %755 = vmatprep.subr.mxu0 0.0
        %756 = vmatpush1.msra.mxu0 0.0
        %757 = vmatprep.subr.mxu0 0.0
        %758 = vmatpush1.msra.mxu0 0.0
        %759 = vmatprep.subr.mxu0 0.0
        %760 = vmatpush1.msra.mxu0 0.0
        %761 = vmatprep.subr.mxu0 0.0
        %762 = vmatpush1.msra.mxu0 0.0
        %763 = vmatprep.subr.mxu0 0.0
        %764 = vmatpush1.msra.mxu0 0.0
        %765 = vmatprep.subr.mxu0 0.0
        %766 = vmatpush1.msra.mxu0 0.0
        %767 = vmatprep.mubr.f32.mxu0 0.0
        %768 = vmatmul.mubr.f32.gmra.mrb[0].mxu0 %v701
        %v769 = vpop.f32.mrb[0].mxu0
        %v770 = vadd.f32 %v560, %v769
        %v771 = vpop.f32.mrb[0].mxu0
        %v772 = vadd.f32 %v564, %v771
        %773 = vdwg.mxu0
        %v774 = vld [vmem:[%s406] sm:$0xff]
        %v775 = vxor.u32 %v770, 2147483648
        %v776 = vmul.f32 %v775, 1.442695
        %v777 = vpow.pop %v776
        %v778 = vadd.f32 %v777, 1.0
        %v779 = vrcp.pop %v778
        %v780 = vmul.f32 1.0, %v779
        %v781 = vsub.f32 0.0, %v770
        %v782 = vmax.f32 %v781, 0.0
        %vm783 = vcmp.ne.f32.partialorder %v781, %v781
        %v784 = vadd.f32 %v781, 0.0
        %v785 = vand.u32 2147483647, %v781
        %v786 = vsub.f32 0.0, %v785
        %v787 = vmul.f32 %v786, 1.442695
        %v788 = vpow.pop %v787
        %v789 = vadd.f32 %v788, 1.0
        %v790 = vlog2.pop %v789
        %v791 = vmul.f32 %v790, 0.6931472
        %v792 = vmul.f32 -0.5, %v788
        %v793 = vadd.f32 %v792, 1.0
        %v794 = vmul.f32 %v793, %v788
        %v795 = vand.u32 2147483647, %v788
        %vm796 = vcmp.lt.f32.partialorder %v795, 0.0004427343
        %v797 = vsel %vm796, %v794, %v791
        %v798 = vadd.f32 %v782, %v797
        %v799 = vsel %vm783, %v784, %v798
        %v800 = vsub.f32 0.0, %v799
        %v801 = vsub.f32 0.0, %v800
        %v802 = vmul.f32 %v780, %v780
        %804 = vrot.lane.b32.xlu0 %v802, 1
        %v805 = vpop.permute.xlu0 %804
        %v807 = vadd.f32 %v802, %v805
        %v808 = vmul.f32 %v807, 0.5
        %v809 = vadd.f32 %v801, %v808
        %v810 = vsub.f32 %v809, 0.5
        %812 = vrot.lane.b32.xlu0 %v810, 31
        %v813 = vpop.permute.xlu0 %812
        %v815 = vadd.f32 %v694, %v813
        %817 = vrot.lane.b32.xlu0 %v774, 97
        %v818 = vpop.permute.xlu0 %817
        %v820 = vmul.f32 %v780, %v818
        %822 = vrot.lane.b32.xlu0 %v820, 127
        %v823 = vpop.permute.xlu0 %822
        %v825 = vadd.f32 %v780, %v823
        %827 = vset.pattern.permute.xlu0 96
        %828 = vperm.xlu0 %827, %v825
        %v829 = vpop.permute.xlu0 %828
        %v831 = vmul.f32 %v829, %v572
        %v832 = vadd.f32 %v831, %v579
        %835 = vrot.lane.b32.xlu0 %v770, 30
        %v836 = vpop.permute.xlu0 %835
        %837 = vrot.lane.b32.xlu0 %v772, 30
        %v838 = vpop.permute.xlu0 %837
        %vm839 = vcmask 244736
        %v840 = vsel %vm839, %v836, %v838
        %v842 = vadd.f32 %v832, %v840
        %v843 = vxor.u32 %v842, 2147483648
        %v844 = vmul.f32 %v843, 1.442695
        %v845 = vpow.pop %v844
        %v846 = vadd.f32 %v845, 1.0
        %v847 = vrcp.pop %v846
        %v848 = vmul.f32 1.0, %v847
        %849 = vrot.lane.b32.xlu0 %v772, 94
        %v850 = vpop.permute.xlu0 %849
        %v852 = vmul.f32 %v848, %v850
        %854 = vrot.lane.b32.xlu0 %v852, 64
        %v855 = vpop.permute.xlu0 %854
        %v857 = vadd.f32 %v832, %v855
        %v858 = vtanh.pop %v857
        %v859 = vsub.f32 1.0, %v848
        %861 = vrot.lane.b32.xlu0 %v858, 96
        %v862 = vpop.permute.xlu0 %861
        %v864 = vmul.f32 %v859, %v862
        %v865 = vmul.f32 %v848, %v585
        %v866 = vadd.f32 %v864, %v865
        %868 = vrot.lane.b32.xlu0 %v866, 96
        %v869 = vpop.permute.xlu0 %868
        %871 = vst.msk [vmem:[#allocation3] sm:$0xff] %vm587, %v869
        %s872 = scalar_lea.vmem [#allocation2], 8
        %v873 = vld [vmem:[%s872] sm:$0xff]
        %v874 = vadd.f32 %v873, %v770
        %v875 = vxor.u32 %v874, 2147483648
        %v876 = vmul.f32 %v875, 1.442695
        %v877 = vpow.pop %v876
        %v878 = vadd.f32 %v877, 1.0
        %v879 = vrcp.pop %v878
        %v880 = vmul.f32 1.0, %v879
        %881 = vrot.lane.b32.xlu0 %v770, 64
        %v882 = vpop.permute.xlu0 %881
        %v884 = vmul.f32 %v880, %v882
        %886 = vrot.lane.b32.xlu0 %v884, 64
        %v887 = vpop.permute.xlu0 %886
        %v889 = vadd.f32 %v873, %v887
        %v890 = vtanh.pop %v889
        %v891 = vsub.f32 1.0, %v880
        %893 = vrot.lane.b32.xlu0 %v890, 96
        %v894 = vpop.permute.xlu0 %893
        %v896 = vmul.f32 %v891, %v894
        %v897 = vmul.f32 %v880, %v693
        %v898 = vadd.f32 %v896, %v897
        %900 = vrot.lane.b32.xlu0 %v898, 96
        %v901 = vpop.permute.xlu0 %900
        %v903 = vsel %vm587, %v901, %v866
        %v905 = vsel %vm589, %v903, 0
        %907 = vmatprep.subr.mxu0 %v540
        %908 = vmatpush1.msra.mxu0 %v539
        %909 = vmatprep.subr.mxu0 %v542
        %910 = vmatpush1.msra.mxu0 %v541
        %911 = vmatprep.subr.mxu0 %v544
        %912 = vmatpush1.msra.mxu0 %v543
        %913 = vmatprep.subr.mxu0 %v546
        %914 = vmatpush1.msra.mxu0 %v545
        %915 = vmatprep.subr.mxu0 %v548
        %916 = vmatpush1.msra.mxu0 %v547
        %917 = vmatprep.subr.mxu0 %v550
        %918 = vmatpush1.msra.mxu0 %v549
        %919 = vmatprep.subr.mxu0 %v552
        %920 = vmatpush1.msra.mxu0 %v551
        %921 = vmatprep.subr.mxu0 %v554
        %922 = vmatpush1.msra.mxu0 %v553
        %923 = vmatprep.subr.mxu0 0.0
        %924 = vmatpush1.msra.mxu0 0.0
        %925 = vmatprep.subr.mxu0 0.0
        %926 = vmatpush1.msra.mxu0 0.0
        %927 = vmatprep.subr.mxu0 0.0
        %928 = vmatpush1.msra.mxu0 0.0
        %929 = vmatprep.subr.mxu0 0.0
        %930 = vmatpush1.msra.mxu0 0.0
        %931 = vmatprep.subr.mxu0 0.0
        %932 = vmatpush1.msra.mxu0 0.0
        %933 = vmatprep.subr.mxu0 0.0
        %934 = vmatpush1.msra.mxu0 0.0
        %935 = vmatprep.subr.mxu0 0.0
        %936 = vmatpush1.msra.mxu0 0.0
        %937 = vmatprep.subr.mxu0 0.0
        %938 = vmatpush1.msra.mxu0 0.0
        %939 = vmatprep.subr.mxu0 0.0
        %940 = vmatpush1.msra.mxu0 0.0
        %941 = vmatprep.subr.mxu0 0.0
        %942 = vmatpush1.msra.mxu0 0.0
        %943 = vmatprep.subr.mxu0 0.0
        %944 = vmatpush1.msra.mxu0 0.0
        %945 = vmatprep.subr.mxu0 0.0
        %946 = vmatpush1.msra.mxu0 0.0
        %947 = vmatprep.subr.mxu0 0.0
        %948 = vmatpush1.msra.mxu0 0.0
        %949 = vmatprep.subr.mxu0 0.0
        %950 = vmatpush1.msra.mxu0 0.0
        %951 = vmatprep.subr.mxu0 0.0
        %952 = vmatpush1.msra.mxu0 0.0
        %953 = vmatprep.subr.mxu0 0.0
        %954 = vmatpush1.msra.mxu0 0.0
        %955 = vmatprep.subr.mxu0 0.0
        %956 = vmatpush1.msra.mxu0 0.0
        %957 = vmatprep.subr.mxu0 0.0
        %958 = vmatpush1.msra.mxu0 0.0
        %959 = vmatprep.subr.mxu0 0.0
        %960 = vmatpush1.msra.mxu0 0.0
        %961 = vmatprep.subr.mxu0 0.0
        %962 = vmatpush1.msra.mxu0 0.0
        %963 = vmatprep.subr.mxu0 0.0
        %964 = vmatpush1.msra.mxu0 0.0
        %965 = vmatprep.subr.mxu0 0.0
        %966 = vmatpush1.msra.mxu0 0.0
        %967 = vmatprep.subr.mxu0 0.0
        %968 = vmatpush1.msra.mxu0 0.0
        %969 = vmatprep.subr.mxu0 0.0
        %970 = vmatpush1.msra.mxu0 0.0
        %971 = vmatprep.mubr.f32.mxu0 0.0
        %972 = vmatmul.mubr.f32.gmra.mrb[0].mxu0 %v905
        %v973 = vpop.f32.mrb[0].mxu0
        %v974 = vadd.f32 %v560, %v973
        %v975 = vpop.f32.mrb[0].mxu0
        %v976 = vadd.f32 %v564, %v975
        %977 = vdwg.mxu0
        %s978 = scalar_lea.vmem %s406, 8
        %v979 = vld [vmem:[%s978] sm:$0xff]
        %v980 = vxor.u32 %v974, 2147483648
        %v981 = vmul.f32 %v980, 1.442695
        %v982 = vpow.pop %v981
        %v983 = vadd.f32 %v982, 1.0
        %v984 = vrcp.pop %v983
        %v985 = vmul.f32 1.0, %v984
        %v986 = vsub.f32 0.0, %v974
        %v987 = vmax.f32 %v986, 0.0
        %vm988 = vcmp.ne.f32.partialorder %v986, %v986
        %v989 = vadd.f32 %v986, 0.0
        %v990 = vand.u32 2147483647, %v986
        %v991 = vsub.f32 0.0, %v990
        %v992 = vmul.f32 %v991, 1.442695
        %v993 = vpow.pop %v992
        %v994 = vadd.f32 %v993, 1.0
        %v995 = vlog2.pop %v994
        %v996 = vmul.f32 %v995, 0.6931472
        %v997 = vmul.f32 -0.5, %v993
        %v998 = vadd.f32 %v997, 1.0
        %v999 = vmul.f32 %v998, %v993
        %v1000 = vand.u32 2147483647, %v993
        %vm1001 = vcmp.lt.f32.partialorder %v1000, 0.0004427343
        %v1002 = vsel %vm1001, %v999, %v996
        %v1003 = vadd.f32 %v987, %v1002
        %v1004 = vsel %vm988, %v989, %v1003
        %v1005 = vsub.f32 0.0, %v1004
        %v1006 = vsub.f32 0.0, %v1005
        %v1007 = vmul.f32 %v985, %v985
        %1009 = vrot.lane.b32.xlu0 %v1007, 1
        %v1010 = vpop.permute.xlu0 %1009
        %v1012 = vadd.f32 %v1007, %v1010
        %v1013 = vmul.f32 %v1012, 0.5
        %v1014 = vadd.f32 %v1006, %v1013
        %v1015 = vsub.f32 %v1014, 0.5
        %1017 = vrot.lane.b32.xlu0 %v1015, 31
        %v1018 = vpop.permute.xlu0 %1017
        %v1020 = vadd.f32 %v815, %v1018
        %1022 = vrot.lane.b32.xlu0 %v979, 97
        %v1023 = vpop.permute.xlu0 %1022
        %v1025 = vmul.f32 %v985, %v1023
        %1027 = vrot.lane.b32.xlu0 %v1025, 127
        %v1028 = vpop.permute.xlu0 %1027
        %v1030 = vadd.f32 %v985, %v1028
        %1032 = vset.pattern.permute.xlu0 96
        %1033 = vperm.xlu0 %1032, %v1030
        %v1034 = vpop.permute.xlu0 %1033
        %v1036 = vmul.f32 %v1034, %v572
        %v1037 = vadd.f32 %v1036, %v579
        %1040 = vrot.lane.b32.xlu0 %v974, 30
        %v1041 = vpop.permute.xlu0 %1040
        %1042 = vrot.lane.b32.xlu0 %v976, 30
        %v1043 = vpop.permute.xlu0 %1042
        %v1044 = vsel %vm839, %v1041, %v1043
        %v1046 = vadd.f32 %v1037, %v1044
        %v1047 = vxor.u32 %v1046, 2147483648
        %v1048 = vmul.f32 %v1047, 1.442695
        %v1049 = vpow.pop %v1048
        %v1050 = vadd.f32 %v1049, 1.0
        %v1051 = vrcp.pop %v1050
        %v1052 = vmul.f32 1.0, %v1051
        %1053 = vrot.lane.b32.xlu0 %v976, 94
        %v1054 = vpop.permute.xlu0 %1053
        %v1056 = vmul.f32 %v1052, %v1054
        %1058 = vrot.lane.b32.xlu0 %v1056, 64
        %v1059 = vpop.permute.xlu0 %1058
        %v1061 = vadd.f32 %v1037, %v1059
        %v1062 = vtanh.pop %v1061
        %v1063 = vsub.f32 1.0, %v1052
        %1065 = vrot.lane.b32.xlu0 %v1062, 96
        %v1066 = vpop.permute.xlu0 %1065
        %v1068 = vmul.f32 %v1063, %v1066
        %v1069 = vmul.f32 %v1052, %v866
        %v1070 = vadd.f32 %v1068, %v1069
        %1072 = vrot.lane.b32.xlu0 %v1070, 96
        %v1073 = vpop.permute.xlu0 %1072
        %s1075 = scalar_lea.vmem [#allocation3], 8
        %1076 = vst.msk [vmem:[%s1075] sm:$0xff] %vm587, %v1073
        %s1077 = scalar_lea.vmem [#allocation2], 16
        %v1078 = vld [vmem:[%s1077] sm:$0xff]
        %v1079 = vadd.f32 %v1078, %v974
        %v1080 = vxor.u32 %v1079, 2147483648
        %v1081 = vmul.f32 %v1080, 1.442695
        %v1082 = vpow.pop %v1081
        %v1083 = vadd.f32 %v1082, 1.0
        %v1084 = vrcp.pop %v1083
        %v1085 = vmul.f32 1.0, %v1084
        %1086 = vrot.lane.b32.xlu0 %v974, 64
        %v1087 = vpop.permute.xlu0 %1086
        %v1089 = vmul.f32 %v1085, %v1087
        %1091 = vrot.lane.b32.xlu0 %v1089, 64
        %v1092 = vpop.permute.xlu0 %1091
        %v1094 = vadd.f32 %v1078, %v1092
        %v1095 = vtanh.pop %v1094
        %v1096 = vsub.f32 1.0, %v1085
        %1098 = vrot.lane.b32.xlu0 %v1095, 96
        %v1099 = vpop.permute.xlu0 %1098
        %v1101 = vmul.f32 %v1096, %v1099
        %v1102 = vmul.f32 %v1085, %v898
        %v1103 = vadd.f32 %v1101, %v1102
        %1105 = vrot.lane.b32.xlu0 %v1103, 96
        %v1106 = vpop.permute.xlu0 %1105
        %v1108 = vsel %vm587, %v1106, %v1070
        %v1110 = vsel %vm589, %v1108, 0
        %1112 = vmatprep.subr.mxu0 %v540
        %1113 = vmatpush1.msra.mxu0 %v539
        %1114 = vmatprep.subr.mxu0 %v542
        %1115 = vmatpush1.msra.mxu0 %v541
        %1116 = vmatprep.subr.mxu0 %v544
        %1117 = vmatpush1.msra.mxu0 %v543
        %1118 = vmatprep.subr.mxu0 %v546
        %1119 = vmatpush1.msra.mxu0 %v545
        %1120 = vmatprep.subr.mxu0 %v548
        %1121 = vmatpush1.msra.mxu0 %v547
        %1122 = vmatprep.subr.mxu0 %v550
        %1123 = vmatpush1.msra.mxu0 %v549
        %1124 = vmatprep.subr.mxu0 %v552
        %1125 = vmatpush1.msra.mxu0 %v551
        %1126 = vmatprep.subr.mxu0 %v554
        %1127 = vmatpush1.msra.mxu0 %v553
        %1128 = vmatprep.subr.mxu0 0.0
        %1129 = vmatpush1.msra.mxu0 0.0
        %1130 = vmatprep.subr.mxu0 0.0
        %1131 = vmatpush1.msra.mxu0 0.0
        %1132 = vmatprep.subr.mxu0 0.0
        %1133 = vmatpush1.msra.mxu0 0.0
        %1134 = vmatprep.subr.mxu0 0.0
        %1135 = vmatpush1.msra.mxu0 0.0
        %1136 = vmatprep.subr.mxu0 0.0
        %1137 = vmatpush1.msra.mxu0 0.0
        %1138 = vmatprep.subr.mxu0 0.0
        %1139 = vmatpush1.msra.mxu0 0.0
        %1140 = vmatprep.subr.mxu0 0.0
        %1141 = vmatpush1.msra.mxu0 0.0
        %1142 = vmatprep.subr.mxu0 0.0
        %1143 = vmatpush1.msra.mxu0 0.0
        %1144 = vmatprep.subr.mxu0 0.0
        %1145 = vmatpush1.msra.mxu0 0.0
        %1146 = vmatprep.subr.mxu0 0.0
        %1147 = vmatpush1.msra.mxu0 0.0
        %1148 = vmatprep.subr.mxu0 0.0
        %1149 = vmatpush1.msra.mxu0 0.0
        %1150 = vmatprep.subr.mxu0 0.0
        %1151 = vmatpush1.msra.mxu0 0.0
        %1152 = vmatprep.subr.mxu0 0.0
        %1153 = vmatpush1.msra.mxu0 0.0
        %1154 = vmatprep.subr.mxu0 0.0
        %1155 = vmatpush1.msra.mxu0 0.0
        %1156 = vmatprep.subr.mxu0 0.0
        %1157 = vmatpush1.msra.mxu0 0.0
        %1158 = vmatprep.subr.mxu0 0.0
        %1159 = vmatpush1.msra.mxu0 0.0
        %1160 = vmatprep.subr.mxu0 0.0
        %1161 = vmatpush1.msra.mxu0 0.0
        %1162 = vmatprep.subr.mxu0 0.0
        %1163 = vmatpush1.msra.mxu0 0.0
        %1164 = vmatprep.subr.mxu0 0.0
        %1165 = vmatpush1.msra.mxu0 0.0
        %1166 = vmatprep.subr.mxu0 0.0
        %1167 = vmatpush1.msra.mxu0 0.0
        %1168 = vmatprep.subr.mxu0 0.0
        %1169 = vmatpush1.msra.mxu0 0.0
        %1170 = vmatprep.subr.mxu0 0.0
        %1171 = vmatpush1.msra.mxu0 0.0
        %1172 = vmatprep.subr.mxu0 0.0
        %1173 = vmatpush1.msra.mxu0 0.0
        %1174 = vmatprep.subr.mxu0 0.0
        %1175 = vmatpush1.msra.mxu0 0.0
        %1176 = vmatprep.mubr.f32.mxu0 0.0
        %1177 = vmatmul.mubr.f32.gmra.mrb[0].mxu0 %v1110
        %v1178 = vpop.f32.mrb[0].mxu0
        %v1179 = vadd.f32 %v560, %v1178
        %v1180 = vpop.f32.mrb[0].mxu0
        %v1181 = vadd.f32 %v564, %v1180
        %1182 = vdwg.mxu0
        %s1183 = scalar_lea.vmem %s406, 16
        %v1184 = vld [vmem:[%s1183] sm:$0xff]
        %v1185 = vxor.u32 %v1179, 2147483648
        %v1186 = vmul.f32 %v1185, 1.442695
        %v1187 = vpow.pop %v1186
        %v1188 = vadd.f32 %v1187, 1.0
        %v1189 = vrcp.pop %v1188
        %v1190 = vmul.f32 1.0, %v1189
        %v1191 = vsub.f32 0.0, %v1179
        %v1192 = vmax.f32 %v1191, 0.0
        %vm1193 = vcmp.ne.f32.partialorder %v1191, %v1191
        %v1194 = vadd.f32 %v1191, 0.0
        %v1195 = vand.u32 2147483647, %v1191
        %v1196 = vsub.f32 0.0, %v1195
        %v1197 = vmul.f32 %v1196, 1.442695
        %v1198 = vpow.pop %v1197
        %v1199 = vadd.f32 %v1198, 1.0
        %v1200 = vlog2.pop %v1199
        %v1201 = vmul.f32 %v1200, 0.6931472
        %v1202 = vmul.f32 -0.5, %v1198
        %v1203 = vadd.f32 %v1202, 1.0
        %v1204 = vmul.f32 %v1203, %v1198
        %v1205 = vand.u32 2147483647, %v1198
        %vm1206 = vcmp.lt.f32.partialorder %v1205, 0.0004427343
        %v1207 = vsel %vm1206, %v1204, %v1201
        %v1208 = vadd.f32 %v1192, %v1207
        %v1209 = vsel %vm1193, %v1194, %v1208
        %v1210 = vsub.f32 0.0, %v1209
        %v1211 = vsub.f32 0.0, %v1210
        %v1212 = vmul.f32 %v1190, %v1190
        %1214 = vrot.lane.b32.xlu0 %v1212, 1
        %v1215 = vpop.permute.xlu0 %1214
        %v1217 = vadd.f32 %v1212, %v1215
        %v1218 = vmul.f32 %v1217, 0.5
        %v1219 = vadd.f32 %v1211, %v1218
        %v1220 = vsub.f32 %v1219, 0.5
        %1222 = vrot.lane.b32.xlu0 %v1220, 31
        %v1223 = vpop.permute.xlu0 %1222
        %v1225 = vadd.f32 %v1020, %v1223
        %1227 = vrot.lane.b32.xlu0 %v1184, 97
        %v1228 = vpop.permute.xlu0 %1227
        %v1230 = vmul.f32 %v1190, %v1228
        %1232 = vrot.lane.b32.xlu0 %v1230, 127
        %v1233 = vpop.permute.xlu0 %1232
        %v1235 = vadd.f32 %v1190, %v1233
        %1237 = vset.pattern.permute.xlu0 96
        %1238 = vperm.xlu0 %1237, %v1235
        %v1239 = vpop.permute.xlu0 %1238
        %v1241 = vmul.f32 %v1239, %v572
        %v1242 = vadd.f32 %v1241, %v579
        %1245 = vrot.lane.b32.xlu0 %v1179, 30
        %v1246 = vpop.permute.xlu0 %1245
        %1247 = vrot.lane.b32.xlu0 %v1181, 30
        %v1248 = vpop.permute.xlu0 %1247
        %v1249 = vsel %vm839, %v1246, %v1248
        %v1251 = vadd.f32 %v1242, %v1249
        %v1252 = vxor.u32 %v1251, 2147483648
        %v1253 = vmul.f32 %v1252, 1.442695
        %v1254 = vpow.pop %v1253
        %v1255 = vadd.f32 %v1254, 1.0
        %v1256 = vrcp.pop %v1255
        %v1257 = vmul.f32 1.0, %v1256
        %1258 = vrot.lane.b32.xlu0 %v1181, 94
        %v1259 = vpop.permute.xlu0 %1258
        %v1261 = vmul.f32 %v1257, %v1259
        %1263 = vrot.lane.b32.xlu0 %v1261, 64
        %v1264 = vpop.permute.xlu0 %1263
        %v1266 = vadd.f32 %v1242, %v1264
        %v1267 = vtanh.pop %v1266
        %v1268 = vsub.f32 1.0, %v1257
        %1270 = vrot.lane.b32.xlu0 %v1267, 96
        %v1271 = vpop.permute.xlu0 %1270
        %v1273 = vmul.f32 %v1268, %v1271
        %v1274 = vmul.f32 %v1257, %v1070
        %v1275 = vadd.f32 %v1273, %v1274
        %1277 = vrot.lane.b32.xlu0 %v1275, 96
        %v1278 = vpop.permute.xlu0 %1277
        %s1280 = scalar_lea.vmem [#allocation3], 16
        %1281 = vst.msk [vmem:[%s1280] sm:$0xff] %vm587, %v1278
        %s1282 = scalar_lea.vmem [#allocation2], 24
        %v1283 = vld [vmem:[%s1282] sm:$0xff]
        %v1284 = vadd.f32 %v1283, %v1179
        %v1285 = vxor.u32 %v1284, 2147483648
        %v1286 = vmul.f32 %v1285, 1.442695
        %v1287 = vpow.pop %v1286
        %v1288 = vadd.f32 %v1287, 1.0
        %v1289 = vrcp.pop %v1288
        %v1290 = vmul.f32 1.0, %v1289
        %1291 = vrot.lane.b32.xlu0 %v1179, 64
        %v1292 = vpop.permute.xlu0 %1291
        %v1294 = vmul.f32 %v1290, %v1292
        %1296 = vrot.lane.b32.xlu0 %v1294, 64
        %v1297 = vpop.permute.xlu0 %1296
        %v1299 = vadd.f32 %v1283, %v1297
        %v1300 = vtanh.pop %v1299
        %v1301 = vsub.f32 1.0, %v1290
        %1303 = vrot.lane.b32.xlu0 %v1300, 96
        %v1304 = vpop.permute.xlu0 %1303
        %v1306 = vmul.f32 %v1301, %v1304
        %v1307 = vmul.f32 %v1290, %v1103
        %v1308 = vadd.f32 %v1306, %v1307
        %1310 = vrot.lane.b32.xlu0 %v1308, 96
        %v1311 = vpop.permute.xlu0 %1310
        %v1313 = vsel %vm587, %v1311, %v1275
        %v1315 = vsel %vm589, %v1313, 0
        %1317 = vmatprep.subr.mxu0 %v540
        %1318 = vmatpush1.msra.mxu0 %v539
        %1319 = vmatprep.subr.mxu0 %v542
        %1320 = vmatpush1.msra.mxu0 %v541
        %1321 = vmatprep.subr.mxu0 %v544
        %1322 = vmatpush1.msra.mxu0 %v543
        %1323 = vmatprep.subr.mxu0 %v546
        %1324 = vmatpush1.msra.mxu0 %v545
        %1325 = vmatprep.subr.mxu0 %v548
        %1326 = vmatpush1.msra.mxu0 %v547
        %1327 = vmatprep.subr.mxu0 %v550
        %1328 = vmatpush1.msra.mxu0 %v549
        %1329 = vmatprep.subr.mxu0 %v552
        %1330 = vmatpush1.msra.mxu0 %v551
        %1331 = vmatprep.subr.mxu0 %v554
        %1332 = vmatpush1.msra.mxu0 %v553
        %1333 = vmatprep.subr.mxu0 0.0
        %1334 = vmatpush1.msra.mxu0 0.0
        %1335 = vmatprep.subr.mxu0 0.0
        %1336 = vmatpush1.msra.mxu0 0.0
        %1337 = vmatprep.subr.mxu0 0.0
        %1338 = vmatpush1.msra.mxu0 0.0
        %1339 = vmatprep.subr.mxu0 0.0
        %1340 = vmatpush1.msra.mxu0 0.0
        %1341 = vmatprep.subr.mxu0 0.0
        %1342 = vmatpush1.msra.mxu0 0.0
        %1343 = vmatprep.subr.mxu0 0.0
        %1344 = vmatpush1.msra.mxu0 0.0
        %1345 = vmatprep.subr.mxu0 0.0
        %1346 = vmatpush1.msra.mxu0 0.0
        %1347 = vmatprep.subr.mxu0 0.0
        %1348 = vmatpush1.msra.mxu0 0.0
        %1349 = vmatprep.subr.mxu0 0.0
        %1350 = vmatpush1.msra.mxu0 0.0
        %1351 = vmatprep.subr.mxu0 0.0
        %1352 = vmatpush1.msra.mxu0 0.0
        %1353 = vmatprep.subr.mxu0 0.0
        %1354 = vmatpush1.msra.mxu0 0.0
        %1355 = vmatprep.subr.mxu0 0.0
        %1356 = vmatpush1.msra.mxu0 0.0
        %1357 = vmatprep.subr.mxu0 0.0
        %1358 = vmatpush1.msra.mxu0 0.0
        %1359 = vmatprep.subr.mxu0 0.0
        %1360 = vmatpush1.msra.mxu0 0.0
        %1361 = vmatprep.subr.mxu0 0.0
        %1362 = vmatpush1.msra.mxu0 0.0
        %1363 = vmatprep.subr.mxu0 0.0
        %1364 = vmatpush1.msra.mxu0 0.0
        %1365 = vmatprep.subr.mxu0 0.0
        %1366 = vmatpush1.msra.mxu0 0.0
        %1367 = vmatprep.subr.mxu0 0.0
        %1368 = vmatpush1.msra.mxu0 0.0
        %1369 = vmatprep.subr.mxu0 0.0
        %1370 = vmatpush1.msra.mxu0 0.0
        %1371 = vmatprep.subr.mxu0 0.0
        %1372 = vmatpush1.msra.mxu0 0.0
        %1373 = vmatprep.subr.mxu0 0.0
        %1374 = vmatpush1.msra.mxu0 0.0
        %1375 = vmatprep.subr.mxu0 0.0
        %1376 = vmatpush1.msra.mxu0 0.0
        %1377 = vmatprep.subr.mxu0 0.0
        %1378 = vmatpush1.msra.mxu0 0.0
        %1379 = vmatprep.subr.mxu0 0.0
        %1380 = vmatpush1.msra.mxu0 0.0
        %1381 = vmatprep.mubr.f32.mxu0 0.0
        %1382 = vmatmul.mubr.f32.gmra.mrb[0].mxu0 %v1315
        %v1383 = vpop.f32.mrb[0].mxu0
        %v1384 = vadd.f32 %v560, %v1383
        %v1385 = vpop.f32.mrb[0].mxu0
        %v1386 = vadd.f32 %v564, %v1385
        %1387 = vdwg.mxu0
        %s1388 = scalar_lea.vmem %s406, 24
        %v1389 = vld [vmem:[%s1388] sm:$0xff]
        %v1390 = vxor.u32 %v1384, 2147483648
        %v1391 = vmul.f32 %v1390, 1.442695
        %v1392 = vpow.pop %v1391
        %v1393 = vadd.f32 %v1392, 1.0
        %v1394 = vrcp.pop %v1393
        %v1395 = vmul.f32 1.0, %v1394
        %v1396 = vsub.f32 0.0, %v1384
        %v1397 = vmax.f32 %v1396, 0.0
        %vm1398 = vcmp.ne.f32.partialorder %v1396, %v1396
        %v1399 = vadd.f32 %v1396, 0.0
        %v1400 = vand.u32 2147483647, %v1396
        %v1401 = vsub.f32 0.0, %v1400
        %v1402 = vmul.f32 %v1401, 1.442695
        %v1403 = vpow.pop %v1402
        %v1404 = vadd.f32 %v1403, 1.0
        %v1405 = vlog2.pop %v1404
        %v1406 = vmul.f32 %v1405, 0.6931472
        %v1407 = vmul.f32 -0.5, %v1403
        %v1408 = vadd.f32 %v1407, 1.0
        %v1409 = vmul.f32 %v1408, %v1403
        %v1410 = vand.u32 2147483647, %v1403
        %vm1411 = vcmp.lt.f32.partialorder %v1410, 0.0004427343
        %v1412 = vsel %vm1411, %v1409, %v1406
        %v1413 = vadd.f32 %v1397, %v1412
        %v1414 = vsel %vm1398, %v1399, %v1413
        %v1415 = vsub.f32 0.0, %v1414
        %v1416 = vsub.f32 0.0, %v1415
        %v1417 = vmul.f32 %v1395, %v1395
        %1419 = vrot.lane.b32.xlu0 %v1417, 1
        %v1420 = vpop.permute.xlu0 %1419
        %v1422 = vadd.f32 %v1417, %v1420
        %v1423 = vmul.f32 %v1422, 0.5
        %v1424 = vadd.f32 %v1416, %v1423
        %v1425 = vsub.f32 %v1424, 0.5
        %1427 = vrot.lane.b32.xlu0 %v1425, 31
        %v1428 = vpop.permute.xlu0 %1427
        %v1430 = vadd.f32 %v1225, %v1428
        %1432 = vrot.lane.b32.xlu0 %v1389, 97
        %v1433 = vpop.permute.xlu0 %1432
        %v1435 = vmul.f32 %v1395, %v1433
        %1437 = vrot.lane.b32.xlu0 %v1435, 127
        %v1438 = vpop.permute.xlu0 %1437
        %v1440 = vadd.f32 %v1395, %v1438
        %1442 = vset.pattern.permute.xlu0 96
        %1443 = vperm.xlu0 %1442, %v1440
        %v1444 = vpop.permute.xlu0 %1443
        %v1446 = vmul.f32 %v1444, %v572
        %v1447 = vadd.f32 %v1446, %v579
        %1450 = vrot.lane.b32.xlu0 %v1384, 30
        %v1451 = vpop.permute.xlu0 %1450
        %1452 = vrot.lane.b32.xlu0 %v1386, 30
        %v1453 = vpop.permute.xlu0 %1452
        %v1454 = vsel %vm839, %v1451, %v1453
        %v1456 = vadd.f32 %v1447, %v1454
        %v1457 = vxor.u32 %v1456, 2147483648
        %v1458 = vmul.f32 %v1457, 1.442695
        %v1459 = vpow.pop %v1458
        %v1460 = vadd.f32 %v1459, 1.0
        %v1461 = vrcp.pop %v1460
        %v1462 = vmul.f32 1.0, %v1461
        %1463 = vrot.lane.b32.xlu0 %v1386, 94
        %v1464 = vpop.permute.xlu0 %1463
        %v1466 = vmul.f32 %v1462, %v1464
        %1468 = vrot.lane.b32.xlu0 %v1466, 64
        %v1469 = vpop.permute.xlu0 %1468
        %v1471 = vadd.f32 %v1447, %v1469
        %v1472 = vtanh.pop %v1471
        %v1473 = vsub.f32 1.0, %v1462
        %1475 = vrot.lane.b32.xlu0 %v1472, 96
        %v1476 = vpop.permute.xlu0 %1475
        %v1478 = vmul.f32 %v1473, %v1476
        %v1479 = vmul.f32 %v1462, %v1275
        %v1480 = vadd.f32 %v1478, %v1479
        %1482 = vrot.lane.b32.xlu0 %v1480, 96
        %v1483 = vpop.permute.xlu0 %1482
        %s1485 = scalar_lea.vmem [#allocation3], 24
        %1486 = vst.msk [vmem:[%s1485] sm:$0xff] %vm587, %v1483
        %1487 = vst.msk [vmem:[#allocation4] sm:$0xff] %vm587, %v1311
        %1488 = vst.msk [vmem:[#allocation5] sm:$0xff] %vm587, %v1483
        %vm1489 = vcmask 7168
        %1490 = vst.msk [vmem:[#allocation6] sm:$0xff] %vm1489, %v1430
        %v1491 = vld [vmem:[#allocation3] sm:$0xff]
        %v1492 = vld [vmem:[#allocation3 + $0x8] sm:$0xff]
        %v1493 = vld [vmem:[#allocation3 + $0x10] sm:$0xff]
        %v1494 = vld [vmem:[#allocation3 + $0x18] sm:$0xff]
        %v1495 = vld [vmem:[%s8] sm:$0xff]
        %v1496 = vld [vmem:[%s8 + $0x8] sm:$0xff]
        %v1497 = vld [vmem:[%s8 + $0x10] sm:$0xff]
        %v1498 = vld [vmem:[%s8 + $0x18] sm:$0xff]
        %v1499 = vld [vmem:[%s9] sm:$0x1]
        %v1501 = vlaneseq
        %v1502 = vshrl.u32 %v1501, 7
        %v1503 = vsub.s32 0, %v1502
        %v1504 = vrot.slane %v1499, %v1503
        %v1507 = vsel %vm587, %v1491, 0
        %v1510 = vsel %vm587, %v1492, 0
        %v1513 = vsel %vm587, %v1493, 0
        %v1516 = vsel %vm587, %v1494, 0
        %1518 = vmatprep.subr.mxu0 0.0
        %1519 = vmatpush1.msra.mxu0 %v1495
        %1520 = vmatprep.subr.mxu0 0.0
        %1521 = vmatpush1.msra.mxu0 %v1496
        %1522 = vmatprep.subr.mxu0 0.0
        %1523 = vmatpush1.msra.mxu0 %v1497
        %1524 = vmatprep.subr.mxu0 0.0
        %1525 = vmatpush1.msra.mxu0 %v1498
        %1526 = vmatprep.subr.mxu0 0.0
        %1527 = vmatpush1.msra.mxu0 0.0
        %1528 = vmatprep.subr.mxu0 0.0
        %1529 = vmatpush1.msra.mxu0 0.0
        %1530 = vmatprep.subr.mxu0 0.0
        %1531 = vmatpush1.msra.mxu0 0.0
        %1532 = vmatprep.subr.mxu0 0.0
        %1533 = vmatpush1.msra.mxu0 0.0
        %1534 = vmatprep.subr.mxu0 0.0
        %1535 = vmatpush1.msra.mxu0 0.0
        %1536 = vmatprep.subr.mxu0 0.0
        %1537 = vmatpush1.msra.mxu0 0.0
        %1538 = vmatprep.subr.mxu0 0.0
        %1539 = vmatpush1.msra.mxu0 0.0
        %1540 = vmatprep.subr.mxu0 0.0
        %1541 = vmatpush1.msra.mxu0 0.0
        %1542 = vmatprep.subr.mxu0 0.0
        %1543 = vmatpush1.msra.mxu0 0.0
        %1544 = vmatprep.subr.mxu0 0.0
        %1545 = vmatpush1.msra.mxu0 0.0
        %1546 = vmatprep.subr.mxu0 0.0
        %1547 = vmatpush1.msra.mxu0 0.0
        %1548 = vmatprep.subr.mxu0 0.0
        %1549 = vmatpush1.msra.mxu0 0.0
        %1550 = vmatprep.subr.mxu0 0.0
        %1551 = vmatpush1.msra.mxu0 0.0
        %1552 = vmatprep.subr.mxu0 0.0
        %1553 = vmatpush1.msra.mxu0 0.0
        %1554 = vmatprep.subr.mxu0 0.0
        %1555 = vmatpush1.msra.mxu0 0.0
        %1556 = vmatprep.subr.mxu0 0.0
        %1557 = vmatpush1.msra.mxu0 0.0
        %1558 = vmatprep.subr.mxu0 0.0
        %1559 = vmatpush1.msra.mxu0 0.0
        %1560 = vmatprep.subr.mxu0 0.0
        %1561 = vmatpush1.msra.mxu0 0.0
        %1562 = vmatprep.subr.mxu0 0.0
        %1563 = vmatpush1.msra.mxu0 0.0
        %1564 = vmatprep.subr.mxu0 0.0
        %1565 = vmatpush1.msra.mxu0 0.0
        %1566 = vmatprep.subr.mxu0 0.0
        %1567 = vmatpush1.msra.mxu0 0.0
        %1568 = vmatprep.subr.mxu0 0.0
        %1569 = vmatpush1.msra.mxu0 0.0
        %1570 = vmatprep.subr.mxu0 0.0
        %1571 = vmatpush1.msra.mxu0 0.0
        %1572 = vmatprep.subr.mxu0 0.0
        %1573 = vmatpush1.msra.mxu0 0.0
        %1574 = vmatprep.subr.mxu0 0.0
        %1575 = vmatpush1.msra.mxu0 0.0
        %1576 = vmatprep.subr.mxu0 0.0
        %1577 = vmatpush1.msra.mxu0 0.0
        %1578 = vmatprep.subr.mxu0 0.0
        %1579 = vmatpush1.msra.mxu0 0.0
        %1580 = vmatprep.subr.mxu0 0.0
        %1581 = vmatpush1.msra.mxu0 0.0
        %1582 = vmatprep.mubr.f32.mxu0 0.0
        %1583 = vmatmul.mubr.f32.gmra.mrb[0].mxu0 %v1507
        %v1584 = vpop.f32.mrb[0].mxu0
        %v1585 = vadd.f32 %v1504, %v1584
        %v1586 = vpop.f32.mrb[0].mxu0
        %1587 = vmatprep.mubr.f32.mxu0 0.0
        %1588 = vmatmul.mubr.f32.gmra.mrb[0].mxu0 %v1510
        %v1589 = vpop.f32.mrb[0].mxu0
        %v1590 = vadd.f32 %v1504, %v1589
        %v1591 = vpop.f32.mrb[0].mxu0
        %1592 = vmatprep.mubr.f32.mxu0 0.0
        %1593 = vmatmul.mubr.f32.gmra.mrb[0].mxu0 %v1513
        %v1594 = vpop.f32.mrb[0].mxu0
        %v1595 = vadd.f32 %v1504, %v1594
        %v1596 = vpop.f32.mrb[0].mxu0
        %1597 = vmatprep.mubr.f32.mxu0 0.0
        %1598 = vmatmul.mubr.f32.gmra.mrb[0].mxu0 %v1516
        %v1599 = vpop.f32.mrb[0].mxu0
        %v1600 = vadd.f32 %v1504, %v1599
        %v1601 = vpop.f32.mrb[0].mxu0
        %1602 = vdwg.mxu0
        %1603 = vst [vmem:[%s393] sm:$0xff] %v1585
        %1604 = vst [vmem:[%s393 + $0x8] sm:$0xff] %v1590
        %1605 = vst [vmem:[%s393 + $0x10] sm:$0xff] %v1595
        %1606 = vst [vmem:[%s393 + $0x18] sm:$0xff] %v1600
        %p1607 = scmp.eq.s32.totalorder %s27, 1
        // Predicated region
        $region65: #{tpu_custom_call.1} parent=59 // pred_check
          %p1608 = pneg %p1607
        $region66: #{tpu_custom_call.1} parent=59 // pred_check_branch
          %1610 = sbr.rel (%p1608) target = $region68
        $region67: #{tpu_custom_call.1} parent=59 // pred_region
          %vm1611 = vcmask 1024
          %v1612 = vsel %vm1611, %v1430, 0.0
          %1613 = vadd.xlane.f32.xlu0 %v1612
          %v1614 = vpop.xlane.xlu0 %1613
          %v1615 = vrot.slane %v1614, 4
          %v1616 = vadd.f32 %v1614, %v1615
          %v1617 = vrot.slane %v1616, 2
          %v1618 = vadd.f32 %v1616, %v1617
          %v1619 = vrot.slane %v1618, 1
          %v1620 = vadd.f32 %v1618, %v1619
          %s1621 = vtos %v1620
          %s1622 = smul.f32 %s1621, 0.0625
          %v1623 = vstv %s1622
          %vm1624 = vcmask 0
          %1625 = vst.msk [vmem:[#allocation9] sm:$0x1] %vm1624, %v1623
        $region68: #{tpu_custom_call.1} parent=59 // pred_fallthru
          _
        %s1626 = sand.u32 %s255, 1
        %s1627 = scalar_lea.sflag [#allocation8], %s1626
        %s1628 = sand.u32 %s255, 1
        %s1629 = smul.addr %s1628, 32
        %s1630 = scalar_lea.vmem [#allocation7], %s1629
        // Predicated region
        $region69: #{tpu_custom_call.1} parent=59 // pred_check
          %p1631 = pneg %p265
        $region70: #{tpu_custom_call.1} parent=59 // pred_check_branch
          %1633 = sbr.rel (%p1631) target = $region72
        $region71: #{tpu_custom_call.1} parent=59 // pred_region
          %s1634 = smul.u32 4, %s27
          %s1636 = ssub.s32 512, 512
          %1637 = vsyncadd %s1627, %s1636
          %s1638 = smul.addr %s1634, 128
          %s1639 = scalar_lea.hbm %s10, %s1638
          %s1640 = sshll.u32 %s1630, 4
          %s1641 = int_to_ptr.vmem [resolvable:$true] %s1640
          %1646 = dma.vmem_to_hbm [thread:$0]  %s1641, 512, %s1639, %s1627, 128, 128, 8
        $region72: #{tpu_custom_call.1} parent=59 // pred_fallthru
          _
        // Predicated region
        $region73: #{tpu_custom_call.1} parent=59 // pred_check
          %p1647 = pneg %p286
        $region74: #{tpu_custom_call.1} parent=59 // pred_check_branch
          %1649 = sbr.rel (%p1647) target = $region76
        $region75: #{tpu_custom_call.1} parent=59 // pred_region
          %s1651 = ssub.s32 16, 16
          %1652 = vsyncadd [#allocation10], %s1651
          %s1654 = sshll.u32 [#allocation9], 4
          %s1655 = int_to_ptr.vmem [resolvable:$true] %s1654
          %1657 = dma.vmem_to_hbm [thread:$0]  %s1655, 16, %s11, [#allocation10]
        $region76: #{tpu_custom_call.1} parent=59 // pred_fallthru
          _
        // Predicated region
        $region77: #{tpu_custom_call.1} parent=59 // pred_check
          %p1658 = pneg %p286
        $region78: #{tpu_custom_call.1} parent=59 // pred_check_branch
          %1660 = sbr.rel (%p1658) target = $region80
        $region79: #{tpu_custom_call.1} parent=59 // pred_region
          %1661 = dma.done [#allocation10], 16
        $region80: #{tpu_custom_call.1} parent=59 // pred_fallthru
          _
      $region60: #{tpu_custom_call.1} parent=5 // pred_fallthru
        _
      %p1662 = scmp.le.s32.totalorder 2, %s22
      // Predicated region
      $region81: #{tpu_custom_call.1} parent=5 // pred_check
        %p1663 = pneg %p1662
      $region82: #{tpu_custom_call.1} parent=5 // pred_check_branch
        %1665 = sbr.rel (%p1663) target = $region84
      $region83: #{tpu_custom_call.1} parent=5 // pred_region
        %s1666 = ssub.s32 %s22, 2
        // Predicated region
        $region85: #{tpu_custom_call.1} parent=83 // pred_check
          %p1667 = pneg %p271
        $region86: #{tpu_custom_call.1} parent=83 // pred_check_branch
          %1669 = sbr.rel (%p1667) target = $region88
        $region87: #{tpu_custom_call.1} parent=83 // pred_region
          %s1670 = sand.u32 %s256, 1
          %s1671 = scalar_lea.sflag [#allocation8], %s1670
          %s1672 = sand.u32 %s256, 1
          %s1673 = smul.addr %s1672, 32
          %s1674 = scalar_lea.vmem [#allocation7], %s1673
          %1675 = dma.done %s1671, 512
        $region88: #{tpu_custom_call.1} parent=83 // pred_fallthru
          _
      $region84: #{tpu_custom_call.1} parent=5 // pred_fallthru
        _
    $region6: #{tpu_custom_call.1} parent=1 // loop_footer
      %s26 = sadd.s32 1, %s22
    $region7: #{tpu_custom_call.1} parent=1 // loop_footer_branch
      %21 = sbr.rel target = $region3
    $region8: #{tpu_custom_call.1} parent=1 // loop_exit
      _
    %1676 = vsyncpa [#allocation8], 1
    %s1677 = scalar_lea.sflag [#allocation8], 1
    %1678 = vsyncpa %s1677, 1
    %1679 = vsyncpa [#allocation10], 1

</llo_original>
